<compile_context>
chip_gen: v5e
topology: v5e:2x2
jax: 0.10.0
libtpu: 0.0.40
codegen_flags: <defaults>
</compile_context>

<pallas_src>
import jax
import jax.numpy as jnp
from jax.experimental import pallas as pl
from jax.experimental.pallas import tpu as pltpu


def _self_attn_kernel(x_ref, wq_ref, bq_ref, wk_ref, bk_ref, wv_ref, bv_ref,
                      gamma_ref, o_ref):
    # x_ref : (1, C, N)  spatial-minor input tile (one batch element)
    # w*_ref: (C_l, C) / (C, C)   1x1-conv weights (already squeezed)
    # b*_ref: (C_l, 1) / (C, 1)   biases (broadcast along lanes)
    # gamma_ref: (1,) scalar in SMEM
    # o_ref : (1, C, N)
    f32 = jnp.float32
    x = x_ref[0]                                                   # (C, N)

    # 1x1 convs == channel matmuls; results are lane-dense (·, N).
    q = jnp.dot(wq_ref[...], x, preferred_element_type=f32) + bq_ref[...]
    k = jnp.dot(wk_ref[...], x, preferred_element_type=f32) + bk_ref[...]
    v = jnp.dot(wv_ref[...], x, preferred_element_type=f32) + bv_ref[...]

    # energy[i, j] = sum_c q[c, i] * k[c, j]   -> (N, N), trans_a matmul.
    energy = pl.dot(q, k, trans_a=True)

    # Row softmax (reductions along the lane axis).
    m = jnp.max(energy, axis=-1, keepdims=True)
    e = jnp.exp(energy - m)
    s = jnp.sum(e, axis=-1, keepdims=True)
    attn = e / s                                                   # (N, N)

    # out[c, i] = sum_j v[c, j] * attn[i, j]   -> (C, N), trans_b matmul.
    out = pl.dot(v, attn, trans_b=True)

    gamma = gamma_ref[0]
    o_ref[0] = (gamma * out + x).astype(o_ref.dtype)


def self_attn_module(x, wq, bq, wk, bk, wv, bv, gamma):
    """Pallas implementation of SelfAttnModule.forward.

    x     : [B, C, H, W]
    wq/wk : [C_l, C, 1, 1], bq/bk : [C_l]
    wv    : [C,   C, 1, 1], bv    : [C]
    gamma : [1]
    returns [B, C, H, W]
    """
    B, C, H, W = x.shape
    N = H * W
    Cl = wq.shape[0]

    # NCHW -> (B, C, H*W): pure reshape, no transpose / HBM relayout.
    x_flat = x.reshape(B, C, N)
    wq2 = wq.reshape(Cl, C)
    wk2 = wk.reshape(Cl, C)
    wv2 = wv.reshape(C, C)
    bq2 = bq.reshape(Cl, 1)
    bk2 = bk.reshape(Cl, 1)
    bv2 = bv.reshape(C, 1)
    gamma1 = gamma.reshape(1).astype(x.dtype)

    out_flat = pl.pallas_call(
        _self_attn_kernel,
        out_shape=jax.ShapeDtypeStruct((B, C, N), x.dtype),
        grid_spec=pltpu.PrefetchScalarGridSpec(
            num_scalar_prefetch=0,
            grid=(B,),
            in_specs=[
                pl.BlockSpec((1, C, N), lambda b: (b, 0, 0)),     # x
                pl.BlockSpec((Cl, C), lambda b: (0, 0)),          # Wq
                pl.BlockSpec((Cl, 1), lambda b: (0, 0)),          # bq
                pl.BlockSpec((Cl, C), lambda b: (0, 0)),          # Wk
                pl.BlockSpec((Cl, 1), lambda b: (0, 0)),          # bk
                pl.BlockSpec((C, C), lambda b: (0, 0)),           # Wv
                pl.BlockSpec((C, 1), lambda b: (0, 0)),           # bv
                pl.BlockSpec(memory_space=pltpu.MemorySpace.SMEM),  # gamma
            ],
            out_specs=pl.BlockSpec((1, C, N), lambda b: (b, 0, 0)),
        ),
        compiler_params=pltpu.CompilerParams(
            dimension_semantics=("parallel",)),
    )(x_flat, wq2, bq2, wk2, bk2, wv2, bv2, gamma1)

    # TODO(synk): for large H*W (N^2 attention matrix exceeding VMEM) tile the
    # query rows and use an online-softmax (flash-style) accumulation.
    return out_flat.reshape(B, C, H, W)


def _reference(x, wq, bq, wk, bk, wv, bv, gamma):
    """Pure-JAX reference mirroring the PyTorch forward."""
    B, C, H, W = x.shape
    N = H * W
    Cl = wq.shape[0]
    hi = jax.lax.Precision.HIGHEST
    X = x.reshape(B, C, N)
    q = jnp.einsum('lc,bcn->bln', wq.reshape(Cl, C), X, precision=hi) + bq[None, :, None]
    k = jnp.einsum('lc,bcn->bln', wk.reshape(Cl, C), X, precision=hi) + bk[None, :, None]
    v = jnp.einsum('oc,bcn->bon', wv.reshape(C, C), X, precision=hi) + bv[None, :, None]
    energy = jnp.einsum('bci,bcj->bij', q, k, precision=hi)          # (B, N, N)
    attn = jax.nn.softmax(energy, axis=-1)
    out = jnp.einsum('bcj,bij->bci', v, attn, precision=hi)          # (B, C, N)
    out = gamma.reshape(()) * out + X
    return out.reshape(B, C, H, W)


if __name__ == "__main__":
    # Module config: in_dim=64, latent_dim=8 -> channel_latent=8.
    key = jax.random.PRNGKey(0)
    kx, kq, kk, kv, kbq, kbk, kbv = jax.random.split(key, 7)

    B, C, H, W = 2, 64, 16, 16
    latent_dim = 8
    Cl = C // latent_dim

    x = jax.random.normal(kx, (B, C, H, W), dtype=jnp.float32)
    wq = jax.random.normal(kq, (Cl, C, 1, 1), dtype=jnp.float32) * 0.1
    wk = jax.random.normal(kk, (Cl, C, 1, 1), dtype=jnp.float32) * 0.1
    wv = jax.random.normal(kv, (C, C, 1, 1), dtype=jnp.float32) * 0.1
    bq = jax.random.normal(kbq, (Cl,), dtype=jnp.float32) * 0.1
    bk = jax.random.normal(kbk, (Cl,), dtype=jnp.float32) * 0.1
    bv = jax.random.normal(kbv, (C,), dtype=jnp.float32) * 0.1
    # nn.Parameter(torch.zeros(1)) at init; use a nonzero value so the
    # attention path actually contributes to the checked output.
    gamma = jnp.asarray([0.5], dtype=jnp.float32)

    out = jax.block_until_ready(
        self_attn_module(x, wq, bq, wk, bk, wv, bv, gamma))
    ref = jax.block_until_ready(
        _reference(x, wq, bq, wk, bk, wv, bv, gamma))

    assert out.shape == (B, C, H, W), out.shape
    assert jnp.allclose(out, ref, atol=1e-3, rtol=1e-3), \
        float(jnp.max(jnp.abs(out - ref)))

    print("KERNEL_OK")
</pallas_src>

<mosaic_0001>
module attributes {stable_mosaic.version = 11 : i64} {
  func.func @_self_attn_kernel(%arg0: i32, %arg1: memref<1x64x256xf32, #tpu.memory_space<vmem>>, %arg2: memref<8x64xf32, #tpu.memory_space<vmem>>, %arg3: memref<8x1xf32, #tpu.memory_space<vmem>>, %arg4: memref<8x64xf32, #tpu.memory_space<vmem>>, %arg5: memref<8x1xf32, #tpu.memory_space<vmem>>, %arg6: memref<64x64xf32, #tpu.memory_space<vmem>>, %arg7: memref<64x1xf32, #tpu.memory_space<vmem>>, %arg8: memref<1xf32, #tpu.memory_space<smem>>, %arg9: memref<1x64x256xf32, #tpu.memory_space<vmem>>) attributes {dimension_semantics = [#tpu.dimension_semantics<parallel>], iteration_bounds = array<i64: 2>, scalar_prefetch = 0 : i64, scratch_operands = 0 : i64, tpu.core_type = #tpu.core_type<tc>, window_params = [{transform_indices = @transform_0, window_bounds = array<i64: 1, 64, 256>}, {pipeline_mode = #tpu.pipeline_mode<synchronous>, transform_indices = @transform_1, window_bounds = array<i64: 8, 64>}, {pipeline_mode = #tpu.pipeline_mode<synchronous>, transform_indices = @transform_2, window_bounds = array<i64: 8, 1>}, {pipeline_mode = #tpu.pipeline_mode<synchronous>, transform_indices = @transform_3, window_bounds = array<i64: 8, 64>}, {pipeline_mode = #tpu.pipeline_mode<synchronous>, transform_indices = @transform_4, window_bounds = array<i64: 8, 1>}, {pipeline_mode = #tpu.pipeline_mode<synchronous>, transform_indices = @transform_5, window_bounds = array<i64: 64, 64>}, {pipeline_mode = #tpu.pipeline_mode<synchronous>, transform_indices = @transform_6, window_bounds = array<i64: 64, 1>}, {transform_indices = @transform_7, window_bounds = array<i64: 1>}, {transform_indices = @transform_8, window_bounds = array<i64: 1, 64, 256>}]} {
    %c0 = arith.constant 0 : index
    %c0_0 = arith.constant 0 : index
    %c0_1 = arith.constant 0 : index
    %0 = vector.load %arg1[%c0, %c0_0, %c0_1] : memref<1x64x256xf32, #tpu.memory_space<vmem>>, vector<1x64x256xf32>
    %1 = vector.shape_cast %0 : vector<1x64x256xf32> to vector<64x256xf32>
    %c0_2 = arith.constant 0 : index
    %c0_3 = arith.constant 0 : index
    %2 = vector.load %arg2[%c0_2, %c0_3] : memref<8x64xf32, #tpu.memory_space<vmem>>, vector<8x64xf32>
    %cst = arith.constant dense<0.000000e+00> : vector<8x256xf32>
    %3 = tpu.matmul %2, %1, %cst {dimension_numbers = #tpu.dot_dimension_numbers<[1], [0], [0], [1], [0, 0, 1, 1], [], []>} : vector<8x64xf32>, vector<64x256xf32>, vector<8x256xf32> -> vector<8x256xf32>
    %c0_4 = arith.constant 0 : index
    %c0_5 = arith.constant 0 : index
    %4 = vector.load %arg3[%c0_4, %c0_5] : memref<8x1xf32, #tpu.memory_space<vmem>>, vector<8x1xf32>
    %5 = vector.broadcast %4 : vector<8x1xf32> to vector<8x256xf32>
    %6 = arith.addf %3, %5 : vector<8x256xf32>
    %c0_6 = arith.constant 0 : index
    %c0_7 = arith.constant 0 : index
    %7 = vector.load %arg4[%c0_6, %c0_7] : memref<8x64xf32, #tpu.memory_space<vmem>>, vector<8x64xf32>
    %cst_8 = arith.constant dense<0.000000e+00> : vector<8x256xf32>
    %8 = tpu.matmul %7, %1, %cst_8 {dimension_numbers = #tpu.dot_dimension_numbers<[1], [0], [0], [1], [0, 0, 1, 1], [], []>} : vector<8x64xf32>, vector<64x256xf32>, vector<8x256xf32> -> vector<8x256xf32>
    %c0_9 = arith.constant 0 : index
    %c0_10 = arith.constant 0 : index
    %9 = vector.load %arg5[%c0_9, %c0_10] : memref<8x1xf32, #tpu.memory_space<vmem>>, vector<8x1xf32>
    %10 = vector.broadcast %9 : vector<8x1xf32> to vector<8x256xf32>
    %11 = arith.addf %8, %10 : vector<8x256xf32>
    %c0_11 = arith.constant 0 : index
    %c0_12 = arith.constant 0 : index
    %12 = vector.load %arg6[%c0_11, %c0_12] : memref<64x64xf32, #tpu.memory_space<vmem>>, vector<64x64xf32>
    %cst_13 = arith.constant dense<0.000000e+00> : vector<64x256xf32>
    %13 = tpu.matmul %12, %1, %cst_13 {dimension_numbers = #tpu.dot_dimension_numbers<[1], [0], [0], [1], [0, 0, 1, 1], [], []>} : vector<64x64xf32>, vector<64x256xf32>, vector<64x256xf32> -> vector<64x256xf32>
    %c0_14 = arith.constant 0 : index
    %c0_15 = arith.constant 0 : index
    %14 = vector.load %arg7[%c0_14, %c0_15] : memref<64x1xf32, #tpu.memory_space<vmem>>, vector<64x1xf32>
    %15 = vector.broadcast %14 : vector<64x1xf32> to vector<64x256xf32>
    %16 = arith.addf %13, %15 : vector<64x256xf32>
    %cst_16 = arith.constant dense<0.000000e+00> : vector<256x256xf32>
    %17 = tpu.matmul %6, %11, %cst_16 {dimension_numbers = #tpu.dot_dimension_numbers<[0], [0], [1], [1], [0, 1, 1, 1], [], []>} : vector<8x256xf32>, vector<8x256xf32>, vector<256x256xf32> -> vector<256x256xf32>
    %cst_17 = arith.constant dense<0xFF800000> : vector<256xf32>
    %18 = vector.multi_reduction <maximumf>, %17, %cst_17 [1] : vector<256x256xf32> to vector<256xf32>
    %19 = vector.shape_cast %18 : vector<256xf32> to vector<256x1xf32>
    %20 = vector.broadcast %19 : vector<256x1xf32> to vector<256x256xf32>
    %21 = arith.subf %17, %20 : vector<256x256xf32>
    %22 = math.exp %21 : vector<256x256xf32>
    %cst_18 = arith.constant dense<0.000000e+00> : vector<256xf32>
    %23 = vector.multi_reduction <add>, %22, %cst_18 [1] : vector<256x256xf32> to vector<256xf32>
    %24 = vector.shape_cast %23 : vector<256xf32> to vector<256x1xf32>
    %25 = vector.broadcast %24 : vector<256x1xf32> to vector<256x256xf32>
    %26 = arith.divf %22, %25 : vector<256x256xf32>
    %cst_19 = arith.constant dense<0.000000e+00> : vector<64x256xf32>
    %27 = tpu.matmul %16, %26, %cst_19 {dimension_numbers = #tpu.dot_dimension_numbers<[1], [1], [0], [0], [0, 0, 1, 0], [], []>} : vector<64x256xf32>, vector<256x256xf32>, vector<64x256xf32> -> vector<64x256xf32>
    %c0_20 = arith.constant 0 : index
    %28 = memref.load %arg8[%c0_20] : memref<1xf32, #tpu.memory_space<smem>>
    %29 = vector.broadcast %28 : f32 to vector<64x256xf32>
    %30 = arith.mulf %29, %27 : vector<64x256xf32>
    %31 = arith.addf %30, %1 : vector<64x256xf32>
    %c0_21 = arith.constant 0 : index
    %c0_22 = arith.constant 0 : index
    %c0_23 = arith.constant 0 : index
    %32 = vector.load %arg9[%c0_21, %c0_22, %c0_23] : memref<1x64x256xf32, #tpu.memory_space<vmem>>, vector<1x64x256xf32>
    %33 = vector.shape_cast %32 : vector<1x64x256xf32> to vector<64x256xf32>
    %34 = vector.shape_cast %31 : vector<64x256xf32> to vector<1x64x256xf32>
    tpu.vector_store %arg9[%c0_21, %c0_22, %c0_23], %34 {strides = array<i32>} : memref<1x64x256xf32, #tpu.memory_space<vmem>>, vector<1x64x256xf32>,
    return
  }
  func.func @transform_0(%arg0: i32) -> (i32, i32, i32) {
    %c0_i32 = arith.constant 0 : i32
    %c0_i32_0 = arith.constant 0 : i32
    %c0_i32_1 = arith.constant 0 : i32
    return %arg0, %c0_i32, %c0_i32_0 : i32, i32, i32
  }
  func.func @transform_1(%arg0: i32) -> (i32, i32) {
    %c0_i32 = arith.constant 0 : i32
    %c0_i32_0 = arith.constant 0 : i32
    %c0_i32_1 = arith.constant 0 : i32
    return %c0_i32, %c0_i32_0 : i32, i32
  }
  func.func @transform_2(%arg0: i32) -> (i32, i32) {
    %c0_i32 = arith.constant 0 : i32
    %c0_i32_0 = arith.constant 0 : i32
    %c0_i32_1 = arith.constant 0 : i32
    return %c0_i32, %c0_i32_0 : i32, i32
  }
  func.func @transform_3(%arg0: i32) -> (i32, i32) {
    %c0_i32 = arith.constant 0 : i32
    %c0_i32_0 = arith.constant 0 : i32
    %c0_i32_1 = arith.constant 0 : i32
    return %c0_i32, %c0_i32_0 : i32, i32
  }
  func.func @transform_4(%arg0: i32) -> (i32, i32) {
    %c0_i32 = arith.constant 0 : i32
    %c0_i32_0 = arith.constant 0 : i32
    %c0_i32_1 = arith.constant 0 : i32
    return %c0_i32, %c0_i32_0 : i32, i32
  }
  func.func @transform_5(%arg0: i32) -> (i32, i32) {
    %c0_i32 = arith.constant 0 : i32
    %c0_i32_0 = arith.constant 0 : i32
    %c0_i32_1 = arith.constant 0 : i32
    return %c0_i32, %c0_i32_0 : i32, i32
  }
  func.func @transform_6(%arg0: i32) -> (i32, i32) {
    %c0_i32 = arith.constant 0 : i32
    %c0_i32_0 = arith.constant 0 : i32
    %c0_i32_1 = arith.constant 0 : i32
    return %c0_i32, %c0_i32_0 : i32, i32
  }
  func.func @transform_7(%arg0: i32) -> i32 {
    %c0_i32 = arith.constant 0 : i32
    %c0_i32_0 = arith.constant 0 : i32
    return %c0_i32 : i32
  }
  func.func @transform_8(%arg0: i32) -> (i32, i32, i32) {
    %c0_i32 = arith.constant 0 : i32
    %c0_i32_0 = arith.constant 0 : i32
    %c0_i32_1 = arith.constant 0 : i32
    return %arg0, %c0_i32, %c0_i32_0 : i32, i32, i32
  }
}

</mosaic_0001>

<llo_original>
// kernel: tpu_custom_call.1
$region0: #{tpu_custom_call.1}
  #allocation0 [shape = 'u32[]', space=smem, size = 0x4, offset = 0x4, fixed_abs, tag = 'smem constant byte address 0x4 - core index']
  #allocation1 [shape = 'u32[72,128]{1,0:T(1,128)}', space=vmem, size = 0x9000, scoped, tag = 'internal scratch']
  #allocation2 [shape = 'f32[1]{0:T(128)S(6)}', space=smem, size = 0x200, scoped, tag = 'scoped memory for tpu_custom_call.1']
  %s0 = inlined_call_operand.hbm [shape: f32[2,64,256], index: 0, kind: input, shape index: {}]
  %s1 = inlined_call_operand.vmem [shape: f32[8,64], index: 1, kind: input, shape index: {}]
  %s2 = inlined_call_operand.vmem [shape: f32[8,1], index: 2, kind: input, shape index: {}]
  %s3 = inlined_call_operand.vmem [shape: f32[8,64], index: 3, kind: input, shape index: {}]
  %s4 = inlined_call_operand.vmem [shape: f32[8,1], index: 4, kind: input, shape index: {}]
  %s5 = inlined_call_operand.vmem [shape: f32[64,64], index: 5, kind: input, shape index: {}]
  %s6 = inlined_call_operand.vmem [shape: f32[64,1], index: 6, kind: input, shape index: {}]
  %s7 = inlined_call_operand.<no memory space> [shape: f32[1], index: 7, kind: input, shape index: {}]
  %s8 = inlined_call_operand.hbm [shape: f32[2,64,256], index: 8, kind: output, shape index: {}]
  %s9 = sld [smem:[#allocation0]]
  $region69: #{tpu_custom_call.1} parent=0
    _
  %s11 = ssub.s32 1, %s9
  %s12 = scalar_select 0, %s11, %s9
  %13 = sst [smem:[#allocation2]] %s7
  $region1: #{tpu_custom_call.1} parent=0
    #allocation3 [shape = 'u8[131072]{0}', space=vmem, size = 0x20000, scoped, tag = 'input window, operand 0']
    #allocation4 [shape = 's32[2]{0}', space=sflag, size = 0x8, scoped, tag = 'scoped memory for tpu_custom_call.1']
    #allocation5 [shape = 's32[2]{0}', space=sflag, size = 0x8, scoped, tag = 'scoped memory for tpu_custom_call.1']
    #allocation6 [shape = 'u8[131072]{0}', space=vmem, size = 0x20000, scoped, tag = 'output window, operand 0']
    %14 = vsyncpa [#allocation4], 0
    %s15 = scalar_lea.sflag [#allocation4], 1
    %16 = vsyncpa %s15, 0
    %17 = vsyncpa [#allocation5], 0
    %s18 = scalar_lea.sflag [#allocation5], 1
    %19 = vsyncpa %s18, 0
    loop: start=0, step=1, limit=4
    $region2: #{tpu_custom_call.1} parent=1 // loop_pre_header
      _
    $region3: #{tpu_custom_call.1} parent=1 // loop_header
      %s21 = sphi 0, %s25
      %p22 = scmp.ge.s32.totalorder %s21, 4
      %s31 = sphi 0, %s33
      %s34 = sphi 0, %s31
      %s35 = sphi 0, %s34
      %s51 = sphi 0, %s35
      %s55 = sphi 0, %s55
      %s57 = sphi 0, %s55
      %s58 = sphi 0, %s57
      %s72 = sphi 0, %s58
      %s76 = sphi 0, %s76
      %s78 = sphi 0, %s76
      %s79 = sphi 0, %s78
      %s93 = sphi 0, %s79
      %s97 = sphi 0, %s97
      %s99 = sphi 0, %s97
      %s100 = sphi 0, %s99
      %s114 = sphi 0, %s100
      %s118 = sphi 0, %s118
      %s120 = sphi 0, %s118
      %s121 = sphi 0, %s120
      %s135 = sphi 0, %s121
      %s139 = sphi 0, %s139
      %s141 = sphi 0, %s139
      %s142 = sphi 0, %s141
      %s156 = sphi 0, %s142
      %s160 = sphi 0, %s160
      %s162 = sphi 0, %s160
      %s163 = sphi 0, %s162
      %s177 = sphi 0, %s163
      %s181 = sphi 0, %s181
      %s183 = sphi 0, %s181
      %s184 = sphi 0, %s183
      %s198 = sphi 0, %s184
      %s204 = sphi 0, %s206
      %s207 = sphi 0, %s204
      %s208 = sphi 0, %s207
      %s224 = sphi 0, %s208
    $region4: #{tpu_custom_call.1} parent=1 // loop_header_branch
      %24 = sbr.rel (%p22) target = $region8
    $region5: #{tpu_custom_call.1} parent=1 // loop_body
      %s26 = ssub.s32 %s21, 1
      %s27 = ssub.s32 %s21, 2
      %s28 = sadd.s32 %s21, 1
      %s29 = ssub.s32 %s21, %s28
      %p30 = scmp.eq.s32.totalorder %s29, 0
      %s32 = sadd.s32 %s31, 1
      %s33 = scalar_select %p30, %s31, %s32
      %p36 = pneg %p30
      %p37 = scmp.eq.s32.totalorder %s21, 1
      %p38 = por %p36, %p37
      %p39 = scmp.ne.s32.totalorder %s31, %s34
      %p40 = scmp.eq.s32.totalorder %s21, 0
      %p41 = por %p39, %p40
      %p42 = scmp.ne.s32.totalorder %s31, %s34
      %p43 = scmp.eq.s32.totalorder %s26, 1
      %p44 = por %p42, %p43
      %p45 = scmp.ne.s32.totalorder %s34, %s35
      %p46 = scmp.eq.s32.totalorder %s26, 0
      %p47 = por %p45, %p46
      %p48 = scmp.ne.s32.totalorder %s34, %s35
      %p49 = scmp.eq.s32.totalorder %s27, 1
      %p50 = por %p48, %p49
      %p52 = scmp.ne.s32.totalorder %s35, %s51
      %p53 = scmp.eq.s32.totalorder %s27, 0
      %p54 = por %p52, %p53
      %s56 = sadd.s32 %s55, 1
      %p59 = scmp.eq.s32.totalorder %s21, 1
      %p60 = scmp.ne.s32.totalorder %s55, %s57
      %p61 = scmp.eq.s32.totalorder %s21, 0
      %p62 = por %p60, %p61
      %p63 = scmp.ne.s32.totalorder %s55, %s57
      %p64 = scmp.eq.s32.totalorder %s26, 1
      %p65 = por %p63, %p64
      %p66 = scmp.ne.s32.totalorder %s57, %s58
      %p67 = scmp.eq.s32.totalorder %s26, 0
      %p68 = por %p66, %p67
      %p69 = scmp.ne.s32.totalorder %s57, %s58
      %p70 = scmp.eq.s32.totalorder %s27, 1
      %p71 = por %p69, %p70
      %p73 = scmp.ne.s32.totalorder %s58, %s72
      %p74 = scmp.eq.s32.totalorder %s27, 0
      %p75 = por %p73, %p74
      %s77 = sadd.s32 %s76, 1
      %p80 = scmp.eq.s32.totalorder %s21, 1
      %p81 = scmp.ne.s32.totalorder %s76, %s78
      %p82 = scmp.eq.s32.totalorder %s21, 0
      %p83 = por %p81, %p82
      %p84 = scmp.ne.s32.totalorder %s76, %s78
      %p85 = scmp.eq.s32.totalorder %s26, 1
      %p86 = por %p84, %p85
      %p87 = scmp.ne.s32.totalorder %s78, %s79
      %p88 = scmp.eq.s32.totalorder %s26, 0
      %p89 = por %p87, %p88
      %p90 = scmp.ne.s32.totalorder %s78, %s79
      %p91 = scmp.eq.s32.totalorder %s27, 1
      %p92 = por %p90, %p91
      %p94 = scmp.ne.s32.totalorder %s79, %s93
      %p95 = scmp.eq.s32.totalorder %s27, 0
      %p96 = por %p94, %p95
      %s98 = sadd.s32 %s97, 1
      %p101 = scmp.eq.s32.totalorder %s21, 1
      %p102 = scmp.ne.s32.totalorder %s97, %s99
      %p103 = scmp.eq.s32.totalorder %s21, 0
      %p104 = por %p102, %p103
      %p105 = scmp.ne.s32.totalorder %s97, %s99
      %p106 = scmp.eq.s32.totalorder %s26, 1
      %p107 = por %p105, %p106
      %p108 = scmp.ne.s32.totalorder %s99, %s100
      %p109 = scmp.eq.s32.totalorder %s26, 0
      %p110 = por %p108, %p109
      %p111 = scmp.ne.s32.totalorder %s99, %s100
      %p112 = scmp.eq.s32.totalorder %s27, 1
      %p113 = por %p111, %p112
      %p115 = scmp.ne.s32.totalorder %s100, %s114
      %p116 = scmp.eq.s32.totalorder %s27, 0
      %p117 = por %p115, %p116
      %s119 = sadd.s32 %s118, 1
      %p122 = scmp.eq.s32.totalorder %s21, 1
      %p123 = scmp.ne.s32.totalorder %s118, %s120
      %p124 = scmp.eq.s32.totalorder %s21, 0
      %p125 = por %p123, %p124
      %p126 = scmp.ne.s32.totalorder %s118, %s120
      %p127 = scmp.eq.s32.totalorder %s26, 1
      %p128 = por %p126, %p127
      %p129 = scmp.ne.s32.totalorder %s120, %s121
      %p130 = scmp.eq.s32.totalorder %s26, 0
      %p131 = por %p129, %p130
      %p132 = scmp.ne.s32.totalorder %s120, %s121
      %p133 = scmp.eq.s32.totalorder %s27, 1
      %p134 = por %p132, %p133
      %p136 = scmp.ne.s32.totalorder %s121, %s135
      %p137 = scmp.eq.s32.totalorder %s27, 0
      %p138 = por %p136, %p137
      %s140 = sadd.s32 %s139, 1
      %p143 = scmp.eq.s32.totalorder %s21, 1
      %p144 = scmp.ne.s32.totalorder %s139, %s141
      %p145 = scmp.eq.s32.totalorder %s21, 0
      %p146 = por %p144, %p145
      %p147 = scmp.ne.s32.totalorder %s139, %s141
      %p148 = scmp.eq.s32.totalorder %s26, 1
      %p149 = por %p147, %p148
      %p150 = scmp.ne.s32.totalorder %s141, %s142
      %p151 = scmp.eq.s32.totalorder %s26, 0
      %p152 = por %p150, %p151
      %p153 = scmp.ne.s32.totalorder %s141, %s142
      %p154 = scmp.eq.s32.totalorder %s27, 1
      %p155 = por %p153, %p154
      %p157 = scmp.ne.s32.totalorder %s142, %s156
      %p158 = scmp.eq.s32.totalorder %s27, 0
      %p159 = por %p157, %p158
      %s161 = sadd.s32 %s160, 1
      %p164 = scmp.eq.s32.totalorder %s21, 1
      %p165 = scmp.ne.s32.totalorder %s160, %s162
      %p166 = scmp.eq.s32.totalorder %s21, 0
      %p167 = por %p165, %p166
      %p168 = scmp.ne.s32.totalorder %s160, %s162
      %p169 = scmp.eq.s32.totalorder %s26, 1
      %p170 = por %p168, %p169
      %p171 = scmp.ne.s32.totalorder %s162, %s163
      %p172 = scmp.eq.s32.totalorder %s26, 0
      %p173 = por %p171, %p172
      %p174 = scmp.ne.s32.totalorder %s162, %s163
      %p175 = scmp.eq.s32.totalorder %s27, 1
      %p176 = por %p174, %p175
      %p178 = scmp.ne.s32.totalorder %s163, %s177
      %p179 = scmp.eq.s32.totalorder %s27, 0
      %p180 = por %p178, %p179
      %s182 = sadd.s32 %s181, 1
      %p185 = scmp.eq.s32.totalorder %s21, 1
      %p186 = scmp.ne.s32.totalorder %s181, %s183
      %p187 = scmp.eq.s32.totalorder %s21, 0
      %p188 = por %p186, %p187
      %p189 = scmp.ne.s32.totalorder %s181, %s183
      %p190 = scmp.eq.s32.totalorder %s26, 1
      %p191 = por %p189, %p190
      %p192 = scmp.ne.s32.totalorder %s183, %s184
      %p193 = scmp.eq.s32.totalorder %s26, 0
      %p194 = por %p192, %p193
      %p195 = scmp.ne.s32.totalorder %s183, %s184
      %p196 = scmp.eq.s32.totalorder %s27, 1
      %p197 = por %p195, %p196
      %p199 = scmp.ne.s32.totalorder %s184, %s198
      %p200 = scmp.eq.s32.totalorder %s27, 0
      %p201 = por %p199, %p200
      %s202 = ssub.s32 %s21, %s28
      %p203 = scmp.eq.s32.totalorder %s202, 0
      %s205 = sadd.s32 %s204, 1
      %s206 = scalar_select %p203, %s204, %s205
      %p209 = pneg %p203
      %p210 = scmp.eq.s32.totalorder %s21, 1
      %p211 = por %p209, %p210
      %p212 = scmp.ne.s32.totalorder %s204, %s207
      %p213 = scmp.eq.s32.totalorder %s21, 0
      %p214 = por %p212, %p213
      %p215 = scmp.ne.s32.totalorder %s204, %s207
      %p216 = scmp.eq.s32.totalorder %s26, 1
      %p217 = por %p215, %p216
      %p218 = scmp.ne.s32.totalorder %s207, %s208
      %p219 = scmp.eq.s32.totalorder %s26, 0
      %p220 = por %p218, %p219
      %p221 = scmp.ne.s32.totalorder %s207, %s208
      %p222 = scmp.eq.s32.totalorder %s27, 1
      %p223 = por %p221, %p222
      %p225 = scmp.ne.s32.totalorder %s208, %s224
      %p226 = scmp.eq.s32.totalorder %s27, 0
      %p227 = por %p225, %p226
      %p228 = scmp.le.s32.totalorder 1, %s21
      %p229 = scmp.lt.s32.totalorder %s21, 3
      %p230 = pnand %p228, %p229
      %p231 = pneg %p230
      // Predicated region
      $region9: #{tpu_custom_call.1} parent=5 // pred_check
        _
      $region10: #{tpu_custom_call.1} parent=5 // pred_check_branch
        %233 = sbr.rel (%p230) target = $region12
      $region11: #{tpu_custom_call.1} parent=5 // pred_region
        %s234 = ssub.s32 %s21, 1
        // Predicated region
        $region13: #{tpu_custom_call.1} parent=11 // pred_check
          %p235 = pneg %p68
        $region14: #{tpu_custom_call.1} parent=11 // pred_check_branch
          %237 = sbr.rel (%p235) target = $region16
        $region15: #{tpu_custom_call.1} parent=11 // pred_region
          _
        $region16: #{tpu_custom_call.1} parent=11 // pred_fallthru
          _
        // Predicated region
        $region17: #{tpu_custom_call.1} parent=11 // pred_check
          %p238 = pneg %p89
        $region18: #{tpu_custom_call.1} parent=11 // pred_check_branch
          %240 = sbr.rel (%p238) target = $region20
        $region19: #{tpu_custom_call.1} parent=11 // pred_region
          _
        $region20: #{tpu_custom_call.1} parent=11 // pred_fallthru
          _
        // Predicated region
        $region21: #{tpu_custom_call.1} parent=11 // pred_check
          %p241 = pneg %p110
        $region22: #{tpu_custom_call.1} parent=11 // pred_check_branch
          %243 = sbr.rel (%p241) target = $region24
        $region23: #{tpu_custom_call.1} parent=11 // pred_region
          _
        $region24: #{tpu_custom_call.1} parent=11 // pred_fallthru
          _
        // Predicated region
        $region25: #{tpu_custom_call.1} parent=11 // pred_check
          %p244 = pneg %p131
        $region26: #{tpu_custom_call.1} parent=11 // pred_check_branch
          %246 = sbr.rel (%p244) target = $region28
        $region27: #{tpu_custom_call.1} parent=11 // pred_region
          _
        $region28: #{tpu_custom_call.1} parent=11 // pred_fallthru
          _
        // Predicated region
        $region29: #{tpu_custom_call.1} parent=11 // pred_check
          %p247 = pneg %p152
        $region30: #{tpu_custom_call.1} parent=11 // pred_check_branch
          %249 = sbr.rel (%p247) target = $region32
        $region31: #{tpu_custom_call.1} parent=11 // pred_region
          _
        $region32: #{tpu_custom_call.1} parent=11 // pred_fallthru
          _
        // Predicated region
        $region33: #{tpu_custom_call.1} parent=11 // pred_check
          %p250 = pneg %p173
        $region34: #{tpu_custom_call.1} parent=11 // pred_check_branch
          %252 = sbr.rel (%p250) target = $region36
        $region35: #{tpu_custom_call.1} parent=11 // pred_region
          _
        $region36: #{tpu_custom_call.1} parent=11 // pred_fallthru
          _
        // Predicated region
        $region37: #{tpu_custom_call.1} parent=11 // pred_check
          %p253 = pneg %p194
        $region38: #{tpu_custom_call.1} parent=11 // pred_check_branch
          %255 = sbr.rel (%p253) target = $region40
        $region39: #{tpu_custom_call.1} parent=11 // pred_region
          _
        $region40: #{tpu_custom_call.1} parent=11 // pred_fallthru
          _
      $region12: #{tpu_custom_call.1} parent=5 // pred_fallthru
        _
      %p256 = scmp.lt.s32.totalorder %s21, 2
      // Predicated region
      $region41: #{tpu_custom_call.1} parent=5 // pred_check
        %p257 = pneg %p256
      $region42: #{tpu_custom_call.1} parent=5 // pred_check_branch
        %259 = sbr.rel (%p257) target = $region44
      $region43: #{tpu_custom_call.1} parent=5 // pred_region
        // Predicated region
        $region45: #{tpu_custom_call.1} parent=43 // pred_check
          %p260 = pneg %p41
        $region46: #{tpu_custom_call.1} parent=43 // pred_check_branch
          %262 = sbr.rel (%p260) target = $region48
        $region47: #{tpu_custom_call.1} parent=43 // pred_region
          %s263 = sand.u32 %s31, 1
          %s264 = scalar_lea.sflag [#allocation4], %s263
          %s265 = sand.u32 %s31, 1
          %s266 = smul.addr %s265, 128
          %s267 = scalar_lea.vmem [#allocation3], %s266
          %269 = vsyncadd %s264, 0
          %s270 = smul.addr %s21, 16
          %s271 = smul.addr %s270, 8
          %s272 = scalar_lea.hbm %s0, %s271
          %s273 = sshll.u32 %s272, 4
          %s274 = int_to_ptr.hbm [resolvable:$true] %s273
          %s275 = sshll.u32 %s267, 4
          %s276 = int_to_ptr.vmem [resolvable:$true] %s275
          %281 = dma.hbm_to_vmem [thread:$0]  %s274, 2048, %s276, %s264, 256, 256, 16
        $region48: #{tpu_custom_call.1} parent=43 // pred_fallthru
          _
      $region44: #{tpu_custom_call.1} parent=5 // pred_fallthru
        _
      %p282 = scmp.le.s32.totalorder 1, %s21
      %p283 = scmp.lt.s32.totalorder %s21, 3
      %p284 = pnand %p282, %p283
      %p285 = pneg %p284
      // Predicated region
      $region49: #{tpu_custom_call.1} parent=5 // pred_check
        _
      $region50: #{tpu_custom_call.1} parent=5 // pred_check_branch
        %287 = sbr.rel (%p284) target = $region52
      $region51: #{tpu_custom_call.1} parent=5 // pred_region
        %s288 = ssub.s32 %s21, 1
        %s289 = sand.u32 %s34, 1
        %s290 = scalar_lea.sflag [#allocation4], %s289
        %s291 = sand.u32 %s34, 1
        %s292 = smul.addr %s291, 128
        %s293 = scalar_lea.vmem [#allocation3], %s292
        // Predicated region
        $region53: #{tpu_custom_call.1} parent=51 // pred_check
          %p294 = pneg %p47
        $region54: #{tpu_custom_call.1} parent=51 // pred_check_branch
          %296 = sbr.rel (%p294) target = $region56
        $region55: #{tpu_custom_call.1} parent=51 // pred_region
          %298 = dma.done %s290, 2048
        $region56: #{tpu_custom_call.1} parent=51 // pred_fallthru
          _
        %s299 = sand.u32 %s34, 1
        %s300 = scalar_lea.sflag [#allocation4], %s299
        %s301 = sand.u32 %s34, 1
        %s302 = smul.addr %s301, 128
        %s303 = scalar_lea.vmem [#allocation3], %s302
        %p304 = pneg %p47
        %p305 = pneg %p44
        %p306 = pneg %p68
        %p307 = pneg %p65
        %p308 = pneg %p89
        %p309 = pneg %p86
        %p310 = pneg %p110
        %p311 = pneg %p107
        %p312 = pneg %p131
        %p313 = pneg %p128
        %p314 = pneg %p152
        %p315 = pneg %p149
        %p316 = pneg %p173
        %p317 = pneg %p170
        %p318 = pneg %p194
        %p319 = pneg %p191
        %p320 = pneg %p220
        %p321 = pneg %p217
        %s322 = sand.u32 %s207, 1
        %s323 = scalar_lea.sflag [#allocation5], %s322
        %s324 = sand.u32 %s207, 1
        %s325 = smul.addr %s324, 128
        %s326 = scalar_lea.vmem [#allocation6], %s325
        %v327 = vld [vmem:[%s293] sm:$0xff]
        %v328 = vld [vmem:[%s293 + $0x8] sm:$0xff]
        %v329 = vld [vmem:[%s293 + $0x10] sm:$0xff]
        %v330 = vld [vmem:[%s293 + $0x18] sm:$0xff]
        %v331 = vld [vmem:[%s293 + $0x20] sm:$0xff]
        %v332 = vld [vmem:[%s293 + $0x28] sm:$0xff]
        %v333 = vld [vmem:[%s293 + $0x30] sm:$0xff]
        %v334 = vld [vmem:[%s293 + $0x38] sm:$0xff]
        %v335 = vld [vmem:[%s293 + $0x40] sm:$0xff]
        %v336 = vld [vmem:[%s293 + $0x48] sm:$0xff]
        %v337 = vld [vmem:[%s293 + $0x50] sm:$0xff]
        %v338 = vld [vmem:[%s293 + $0x58] sm:$0xff]
        %v339 = vld [vmem:[%s293 + $0x60] sm:$0xff]
        %v340 = vld [vmem:[%s293 + $0x68] sm:$0xff]
        %v341 = vld [vmem:[%s293 + $0x70] sm:$0xff]
        %v342 = vld [vmem:[%s293 + $0x78] sm:$0xff]
        %v343 = vld [vmem:[%s1] sm:$0xff]
        %v344 = vld [vmem:[%s2] sm:$0xff]
        %346 = vset.pattern.permute.xlu0 0
        %347 = vperm.xlu0 %346, %v344
        %v348 = vpop.permute.xlu0 %347
        %vm350 = vcmask 523264
        %v352 = vsel %vm350, %v343, 0
        %354 = vmatpush.msra.mxu0 0.0
        %355 = vmatpush.msra.mxu0 0.0
        %356 = vmatpush.msra.mxu0 0.0
        %357 = vmatpush.msra.mxu0 0.0
        %358 = vmatpush.msra.mxu0 0.0
        %359 = vmatpush.msra.mxu0 0.0
        %360 = vmatpush.msra.mxu0 0.0
        %361 = vmatpush.msra.mxu0 0.0
        %362 = vmatpush.msra.mxu0 %v341
        %363 = vmatpush.msra.mxu0 %v339
        %364 = vmatpush.msra.mxu0 %v337
        %365 = vmatpush.msra.mxu0 %v335
        %366 = vmatpush.msra.mxu0 %v333
        %367 = vmatpush.msra.mxu0 %v331
        %368 = vmatpush.msra.mxu0 %v329
        %369 = vmatpush.msra.mxu0 %v327
        %370 = vmatmul.f32.gmra.mxu0 %v352
        %v371 = vpop.f32.mrf.mxu0
        %v372 = vadd.f32 %v348, %v371
        %373 = vdwg.mxu0
        %374 = vmatpush.msra.mxu0 0.0
        %375 = vmatpush.msra.mxu0 0.0
        %376 = vmatpush.msra.mxu0 0.0
        %377 = vmatpush.msra.mxu0 0.0
        %378 = vmatpush.msra.mxu0 0.0
        %379 = vmatpush.msra.mxu0 0.0
        %380 = vmatpush.msra.mxu0 0.0
        %381 = vmatpush.msra.mxu0 0.0
        %382 = vmatpush.msra.mxu0 %v342
        %383 = vmatpush.msra.mxu0 %v340
        %384 = vmatpush.msra.mxu0 %v338
        %385 = vmatpush.msra.mxu0 %v336
        %386 = vmatpush.msra.mxu0 %v334
        %387 = vmatpush.msra.mxu0 %v332
        %388 = vmatpush.msra.mxu0 %v330
        %389 = vmatpush.msra.mxu0 %v328
        %390 = vmatmul.f32.gmra.mxu0 %v352
        %v391 = vpop.f32.mrf.mxu0
        %v392 = vadd.f32 %v348, %v391
        %393 = vdwg.mxu0
        %v394 = vld [vmem:[%s3] sm:$0xff]
        %v395 = vld [vmem:[%s4] sm:$0xff]
        %397 = vset.pattern.permute.xlu0 0
        %398 = vperm.xlu0 %397, %v395
        %v399 = vpop.permute.xlu0 %398
        %v402 = vsel %vm350, %v394, 0
        %404 = vmatpush.msra.mxu0 0.0
        %405 = vmatpush.msra.mxu0 0.0
        %406 = vmatpush.msra.mxu0 0.0
        %407 = vmatpush.msra.mxu0 0.0
        %408 = vmatpush.msra.mxu0 0.0
        %409 = vmatpush.msra.mxu0 0.0
        %410 = vmatpush.msra.mxu0 0.0
        %411 = vmatpush.msra.mxu0 0.0
        %412 = vmatpush.msra.mxu0 %v341
        %413 = vmatpush.msra.mxu0 %v339
        %414 = vmatpush.msra.mxu0 %v337
        %415 = vmatpush.msra.mxu0 %v335
        %416 = vmatpush.msra.mxu0 %v333
        %417 = vmatpush.msra.mxu0 %v331
        %418 = vmatpush.msra.mxu0 %v329
        %419 = vmatpush.msra.mxu0 %v327
        %420 = vmatmul.f32.gmra.mxu0 %v402
        %v421 = vpop.f32.mrf.mxu0
        %v422 = vadd.f32 %v399, %v421
        %423 = vdwg.mxu0
        %424 = vmatpush.msra.mxu0 0.0
        %425 = vmatpush.msra.mxu0 0.0
        %426 = vmatpush.msra.mxu0 0.0
        %427 = vmatpush.msra.mxu0 0.0
        %428 = vmatpush.msra.mxu0 0.0
        %429 = vmatpush.msra.mxu0 0.0
        %430 = vmatpush.msra.mxu0 0.0
        %431 = vmatpush.msra.mxu0 0.0
        %432 = vmatpush.msra.mxu0 %v342
        %433 = vmatpush.msra.mxu0 %v340
        %434 = vmatpush.msra.mxu0 %v338
        %435 = vmatpush.msra.mxu0 %v336
        %436 = vmatpush.msra.mxu0 %v334
        %437 = vmatpush.msra.mxu0 %v332
        %438 = vmatpush.msra.mxu0 %v330
        %439 = vmatpush.msra.mxu0 %v328
        %440 = vmatmul.f32.gmra.mxu0 %v402
        %v441 = vpop.f32.mrf.mxu0
        %v442 = vadd.f32 %v399, %v441
        %443 = vdwg.mxu0
        %v444 = vld [vmem:[%s5] sm:$0xff]
        %v445 = vld [vmem:[%s5 + $0x8] sm:$0xff]
        %v446 = vld [vmem:[%s5 + $0x10] sm:$0xff]
        %v447 = vld [vmem:[%s5 + $0x18] sm:$0xff]
        %v448 = vld [vmem:[%s5 + $0x20] sm:$0xff]
        %v449 = vld [vmem:[%s5 + $0x28] sm:$0xff]
        %v450 = vld [vmem:[%s5 + $0x30] sm:$0xff]
        %v451 = vld [vmem:[%s5 + $0x38] sm:$0xff]
        %v452 = vld [vmem:[%s6] sm:$0xff]
        %v453 = vld [vmem:[%s6 + $0x8] sm:$0xff]
        %v454 = vld [vmem:[%s6 + $0x10] sm:$0xff]
        %v455 = vld [vmem:[%s6 + $0x18] sm:$0xff]
        %v456 = vld [vmem:[%s6 + $0x20] sm:$0xff]
        %v457 = vld [vmem:[%s6 + $0x28] sm:$0xff]
        %v458 = vld [vmem:[%s6 + $0x30] sm:$0xff]
        %v459 = vld [vmem:[%s6 + $0x38] sm:$0xff]
        %461 = vset.pattern.permute.xlu0 0
        %462 = vperm.xlu0 %461, %v452
        %v463 = vpop.permute.xlu0 %462
        %466 = vset.pattern.permute.xlu0 0
        %467 = vperm.xlu0 %466, %v453
        %v468 = vpop.permute.xlu0 %467
        %471 = vset.pattern.permute.xlu0 0
        %472 = vperm.xlu0 %471, %v454
        %v473 = vpop.permute.xlu0 %472
        %476 = vset.pattern.permute.xlu0 0
        %477 = vperm.xlu0 %476, %v455
        %v478 = vpop.permute.xlu0 %477
        %481 = vset.pattern.permute.xlu0 0
        %482 = vperm.xlu0 %481, %v456
        %v483 = vpop.permute.xlu0 %482
        %486 = vset.pattern.permute.xlu0 0
        %487 = vperm.xlu0 %486, %v457
        %v488 = vpop.permute.xlu0 %487
        %491 = vset.pattern.permute.xlu0 0
        %492 = vperm.xlu0 %491, %v458
        %v493 = vpop.permute.xlu0 %492
        %496 = vset.pattern.permute.xlu0 0
        %497 = vperm.xlu0 %496, %v459
        %v498 = vpop.permute.xlu0 %497
        %v501 = vsel %vm350, %v444, 0
        %v504 = vsel %vm350, %v445, 0
        %v507 = vsel %vm350, %v446, 0
        %v510 = vsel %vm350, %v447, 0
        %v513 = vsel %vm350, %v448, 0
        %v516 = vsel %vm350, %v449, 0
        %v519 = vsel %vm350, %v450, 0
        %v522 = vsel %vm350, %v451, 0
        %524 = vmatpush.msra.mxu0 0.0
        %525 = vmatpush.msra.mxu0 0.0
        %526 = vmatpush.msra.mxu0 0.0
        %527 = vmatpush.msra.mxu0 0.0
        %528 = vmatpush.msra.mxu0 0.0
        %529 = vmatpush.msra.mxu0 0.0
        %530 = vmatpush.msra.mxu0 0.0
        %531 = vmatpush.msra.mxu0 0.0
        %532 = vmatpush.msra.mxu0 %v341
        %533 = vmatpush.msra.mxu0 %v339
        %534 = vmatpush.msra.mxu0 %v337
        %535 = vmatpush.msra.mxu0 %v335
        %536 = vmatpush.msra.mxu0 %v333
        %537 = vmatpush.msra.mxu0 %v331
        %538 = vmatpush.msra.mxu0 %v329
        %539 = vmatpush.msra.mxu0 %v327
        %540 = vmatmul.f32.gmra.mxu0 %v501
        %v541 = vpop.f32.mrf.mxu0
        %v542 = vadd.f32 %v463, %v541
        %543 = vmatmul.f32.gmra.mxu0 %v504
        %v544 = vpop.f32.mrf.mxu0
        %v545 = vadd.f32 %v468, %v544
        %546 = vmatmul.f32.gmra.mxu0 %v507
        %v547 = vpop.f32.mrf.mxu0
        %v548 = vadd.f32 %v473, %v547
        %549 = vmatmul.f32.gmra.mxu0 %v510
        %v550 = vpop.f32.mrf.mxu0
        %v551 = vadd.f32 %v478, %v550
        %552 = vmatmul.f32.gmra.mxu0 %v513
        %v553 = vpop.f32.mrf.mxu0
        %v554 = vadd.f32 %v483, %v553
        %555 = vmatmul.f32.gmra.mxu0 %v516
        %v556 = vpop.f32.mrf.mxu0
        %v557 = vadd.f32 %v488, %v556
        %558 = vmatmul.f32.gmra.mxu0 %v519
        %v559 = vpop.f32.mrf.mxu0
        %v560 = vadd.f32 %v493, %v559
        %561 = vmatmul.f32.gmra.mxu0 %v522
        %v562 = vpop.f32.mrf.mxu0
        %v563 = vadd.f32 %v498, %v562
        %564 = vdwg.mxu0
        %565 = vmatpush.msra.mxu0 0.0
        %566 = vmatpush.msra.mxu0 0.0
        %567 = vmatpush.msra.mxu0 0.0
        %568 = vmatpush.msra.mxu0 0.0
        %569 = vmatpush.msra.mxu0 0.0
        %570 = vmatpush.msra.mxu0 0.0
        %571 = vmatpush.msra.mxu0 0.0
        %572 = vmatpush.msra.mxu0 0.0
        %573 = vmatpush.msra.mxu0 %v342
        %574 = vmatpush.msra.mxu0 %v340
        %575 = vmatpush.msra.mxu0 %v338
        %576 = vmatpush.msra.mxu0 %v336
        %577 = vmatpush.msra.mxu0 %v334
        %578 = vmatpush.msra.mxu0 %v332
        %579 = vmatpush.msra.mxu0 %v330
        %580 = vmatpush.msra.mxu0 %v328
        %581 = vmatmul.f32.gmra.mxu0 %v501
        %v582 = vpop.f32.mrf.mxu0
        %v583 = vadd.f32 %v463, %v582
        %584 = vmatmul.f32.gmra.mxu0 %v504
        %v585 = vpop.f32.mrf.mxu0
        %v586 = vadd.f32 %v468, %v585
        %587 = vmatmul.f32.gmra.mxu0 %v507
        %v588 = vpop.f32.mrf.mxu0
        %v589 = vadd.f32 %v473, %v588
        %590 = vmatmul.f32.gmra.mxu0 %v510
        %v591 = vpop.f32.mrf.mxu0
        %v592 = vadd.f32 %v478, %v591
        %593 = vmatmul.f32.gmra.mxu0 %v513
        %v594 = vpop.f32.mrf.mxu0
        %v595 = vadd.f32 %v483, %v594
        %596 = vmatmul.f32.gmra.mxu0 %v516
        %v597 = vpop.f32.mrf.mxu0
        %v598 = vadd.f32 %v488, %v597
        %599 = vmatmul.f32.gmra.mxu0 %v519
        %v600 = vpop.f32.mrf.mxu0
        %v601 = vadd.f32 %v493, %v600
        %602 = vmatmul.f32.gmra.mxu0 %v522
        %v603 = vpop.f32.mrf.mxu0
        %v604 = vadd.f32 %v498, %v603
        %605 = vdwg.mxu0
        %606 = vxpose.xlu0.b32.start [1/16] %v372, 128
        %607 = vxpose.xlu0.b32.cont [2/16] 0.0, 128
        %608 = vxpose.xlu0.b32.cont [3/16] 0.0, 128
        %609 = vxpose.xlu0.b32.cont [4/16] 0.0, 128
        %610 = vxpose.xlu0.b32.cont [5/16] 0.0, 128
        %611 = vxpose.xlu0.b32.cont [6/16] 0.0, 128
        %612 = vxpose.xlu0.b32.cont [7/16] 0.0, 128
        %613 = vxpose.xlu0.b32.cont [8/16] 0.0, 128
        %614 = vxpose.xlu0.b32.cont [9/16] 0.0, 128
        %615 = vxpose.xlu0.b32.cont [10/16] 0.0, 128
        %616 = vxpose.xlu0.b32.cont [11/16] 0.0, 128
        %617 = vxpose.xlu0.b32.cont [12/16] 0.0, 128
        %618 = vxpose.xlu0.b32.cont [13/16] 0.0, 128
        %619 = vxpose.xlu0.b32.cont [14/16] 0.0, 128
        %620 = vxpose.xlu0.b32.cont [15/16] 0.0, 128
        %621 = vxpose.xlu0.b32.end [16/16] 0.0, 128
        %v622 = vpop.trf.xlu0
        %v623 = vpop.trf.xlu0
        %v624 = vpop.trf.xlu0
        %v625 = vpop.trf.xlu0
        %v626 = vpop.trf.xlu0
        %v627 = vpop.trf.xlu0
        %v628 = vpop.trf.xlu0
        %v629 = vpop.trf.xlu0
        %v630 = vpop.trf.xlu0
        %v631 = vpop.trf.xlu0
        %v632 = vpop.trf.xlu0
        %v633 = vpop.trf.xlu0
        %v634 = vpop.trf.xlu0
        %v635 = vpop.trf.xlu0
        %v636 = vpop.trf.xlu0
        %v637 = vpop.trf.xlu0
        %638 = vxpose.xlu0.b32.start [1/16] %v392, 128
        %639 = vxpose.xlu0.b32.cont [2/16] 0.0, 128
        %640 = vxpose.xlu0.b32.cont [3/16] 0.0, 128
        %641 = vxpose.xlu0.b32.cont [4/16] 0.0, 128
        %642 = vxpose.xlu0.b32.cont [5/16] 0.0, 128
        %643 = vxpose.xlu0.b32.cont [6/16] 0.0, 128
        %644 = vxpose.xlu0.b32.cont [7/16] 0.0, 128
        %645 = vxpose.xlu0.b32.cont [8/16] 0.0, 128
        %646 = vxpose.xlu0.b32.cont [9/16] 0.0, 128
        %647 = vxpose.xlu0.b32.cont [10/16] 0.0, 128
        %648 = vxpose.xlu0.b32.cont [11/16] 0.0, 128
        %649 = vxpose.xlu0.b32.cont [12/16] 0.0, 128
        %650 = vxpose.xlu0.b32.cont [13/16] 0.0, 128
        %651 = vxpose.xlu0.b32.cont [14/16] 0.0, 128
        %652 = vxpose.xlu0.b32.cont [15/16] 0.0, 128
        %653 = vxpose.xlu0.b32.end [16/16] 0.0, 128
        %v654 = vpop.trf.xlu0
        %v655 = vpop.trf.xlu0
        %v656 = vpop.trf.xlu0
        %v657 = vpop.trf.xlu0
        %v658 = vpop.trf.xlu0
        %v659 = vpop.trf.xlu0
        %v660 = vpop.trf.xlu0
        %v661 = vpop.trf.xlu0
        %v662 = vpop.trf.xlu0
        %v663 = vpop.trf.xlu0
        %v664 = vpop.trf.xlu0
        %v665 = vpop.trf.xlu0
        %v666 = vpop.trf.xlu0
        %v667 = vpop.trf.xlu0
        %v668 = vpop.trf.xlu0
        %v669 = vpop.trf.xlu0
        %vm670 = vcmask 64512
        %v672 = vsel %vm670, %v622, 0
        %v675 = vsel %vm670, %v623, 0
        %v678 = vsel %vm670, %v624, 0
        %v681 = vsel %vm670, %v625, 0
        %v684 = vsel %vm670, %v626, 0
        %v687 = vsel %vm670, %v627, 0
        %v690 = vsel %vm670, %v628, 0
        %v693 = vsel %vm670, %v629, 0
        %v696 = vsel %vm670, %v630, 0
        %v699 = vsel %vm670, %v631, 0
        %v702 = vsel %vm670, %v632, 0
        %v705 = vsel %vm670, %v633, 0
        %v708 = vsel %vm670, %v634, 0
        %v711 = vsel %vm670, %v635, 0
        %v714 = vsel %vm670, %v636, 0
        %v717 = vsel %vm670, %v637, 0
        %v720 = vsel %vm670, %v654, 0
        %v723 = vsel %vm670, %v655, 0
        %v726 = vsel %vm670, %v656, 0
        %v729 = vsel %vm670, %v657, 0
        %v732 = vsel %vm670, %v658, 0
        %v735 = vsel %vm670, %v659, 0
        %v738 = vsel %vm670, %v660, 0
        %v741 = vsel %vm670, %v661, 0
        %v744 = vsel %vm670, %v662, 0
        %v747 = vsel %vm670, %v663, 0
        %v750 = vsel %vm670, %v664, 0
        %v753 = vsel %vm670, %v665, 0
        %v756 = vsel %vm670, %v666, 0
        %v759 = vsel %vm670, %v667, 0
        %v762 = vsel %vm670, %v668, 0
        %v765 = vsel %vm670, %v669, 0
        %767 = vmatpush.msra.mxu0 0.0
        %768 = vmatpush.msra.mxu0 0.0
        %769 = vmatpush.msra.mxu0 0.0
        %770 = vmatpush.msra.mxu0 0.0
        %771 = vmatpush.msra.mxu0 0.0
        %772 = vmatpush.msra.mxu0 0.0
        %773 = vmatpush.msra.mxu0 0.0
        %774 = vmatpush.msra.mxu0 0.0
        %775 = vmatpush.msra.mxu0 0.0
        %776 = vmatpush.msra.mxu0 0.0
        %777 = vmatpush.msra.mxu0 0.0
        %778 = vmatpush.msra.mxu0 0.0
        %779 = vmatpush.msra.mxu0 0.0
        %780 = vmatpush.msra.mxu0 0.0
        %781 = vmatpush.msra.mxu0 0.0
        %782 = vmatpush.msra.mxu0 %v422
        %783 = vmatmul.f32.gmra.mxu0 %v672
        %v784 = vpop.f32.mrf.mxu0
        %v785 = vadd.f32 0.0, %v784
        %786 = vmatmul.f32.gmra.mxu0 %v675
        %v787 = vpop.f32.mrf.mxu0
        %v788 = vadd.f32 0.0, %v787
        %789 = vmatmul.f32.gmra.mxu0 %v678
        %v790 = vpop.f32.mrf.mxu0
        %v791 = vadd.f32 0.0, %v790
        %792 = vmatmul.f32.gmra.mxu0 %v681
        %v793 = vpop.f32.mrf.mxu0
        %v794 = vadd.f32 0.0, %v793
        %795 = vmatmul.f32.gmra.mxu0 %v684
        %v796 = vpop.f32.mrf.mxu0
        %v797 = vadd.f32 0.0, %v796
        %798 = vmatmul.f32.gmra.mxu0 %v687
        %v799 = vpop.f32.mrf.mxu0
        %v800 = vadd.f32 0.0, %v799
        %801 = vmatmul.f32.gmra.mxu0 %v690
        %v802 = vpop.f32.mrf.mxu0
        %v803 = vadd.f32 0.0, %v802
        %804 = vmatmul.f32.gmra.mxu0 %v693
        %v805 = vpop.f32.mrf.mxu0
        %v806 = vadd.f32 0.0, %v805
        %807 = vmatmul.f32.gmra.mxu0 %v696
        %v808 = vpop.f32.mrf.mxu0
        %v809 = vadd.f32 0.0, %v808
        %810 = vmatmul.f32.gmra.mxu0 %v699
        %v811 = vpop.f32.mrf.mxu0
        %v812 = vadd.f32 0.0, %v811
        %813 = vmatmul.f32.gmra.mxu0 %v702
        %v814 = vpop.f32.mrf.mxu0
        %v815 = vadd.f32 0.0, %v814
        %816 = vmatmul.f32.gmra.mxu0 %v705
        %v817 = vpop.f32.mrf.mxu0
        %v818 = vadd.f32 0.0, %v817
        %819 = vmatmul.f32.gmra.mxu0 %v708
        %v820 = vpop.f32.mrf.mxu0
        %v821 = vadd.f32 0.0, %v820
        %822 = vmatmul.f32.gmra.mxu0 %v711
        %v823 = vpop.f32.mrf.mxu0
        %v824 = vadd.f32 0.0, %v823
        %825 = vmatmul.f32.gmra.mxu0 %v714
        %v826 = vpop.f32.mrf.mxu0
        %v827 = vadd.f32 0.0, %v826
        %828 = vmatmul.f32.gmra.mxu0 %v717
        %v829 = vpop.f32.mrf.mxu0
        %v830 = vadd.f32 0.0, %v829
        %831 = vmatmul.f32.gmra.mxu0 %v720
        %v832 = vpop.f32.mrf.mxu0
        %v833 = vadd.f32 0.0, %v832
        %834 = vmatmul.f32.gmra.mxu0 %v723
        %v835 = vpop.f32.mrf.mxu0
        %v836 = vadd.f32 0.0, %v835
        %837 = vmatmul.f32.gmra.mxu0 %v726
        %v838 = vpop.f32.mrf.mxu0
        %v839 = vadd.f32 0.0, %v838
        %840 = vmatmul.f32.gmra.mxu0 %v729
        %v841 = vpop.f32.mrf.mxu0
        %v842 = vadd.f32 0.0, %v841
        %843 = vmatmul.f32.gmra.mxu0 %v732
        %v844 = vpop.f32.mrf.mxu0
        %v845 = vadd.f32 0.0, %v844
        %846 = vmatmul.f32.gmra.mxu0 %v735
        %v847 = vpop.f32.mrf.mxu0
        %v848 = vadd.f32 0.0, %v847
        %849 = vmatmul.f32.gmra.mxu0 %v738
        %v850 = vpop.f32.mrf.mxu0
        %v851 = vadd.f32 0.0, %v850
        %852 = vmatmul.f32.gmra.mxu0 %v741
        %v853 = vpop.f32.mrf.mxu0
        %v854 = vadd.f32 0.0, %v853
        %855 = vmatmul.f32.gmra.mxu0 %v744
        %v856 = vpop.f32.mrf.mxu0
        %v857 = vadd.f32 0.0, %v856
        %858 = vmatmul.f32.gmra.mxu0 %v747
        %v859 = vpop.f32.mrf.mxu0
        %v860 = vadd.f32 0.0, %v859
        %861 = vmatmul.f32.gmra.mxu0 %v750
        %v862 = vpop.f32.mrf.mxu0
        %v863 = vadd.f32 0.0, %v862
        %864 = vmatmul.f32.gmra.mxu0 %v753
        %v865 = vpop.f32.mrf.mxu0
        %v866 = vadd.f32 0.0, %v865
        %867 = vmatmul.f32.gmra.mxu0 %v756
        %v868 = vpop.f32.mrf.mxu0
        %v869 = vadd.f32 0.0, %v868
        %870 = vmatmul.f32.gmra.mxu0 %v759
        %v871 = vpop.f32.mrf.mxu0
        %v872 = vadd.f32 0.0, %v871
        %873 = vmatmul.f32.gmra.mxu0 %v762
        %v874 = vpop.f32.mrf.mxu0
        %v875 = vadd.f32 0.0, %v874
        %876 = vmatmul.f32.gmra.mxu0 %v765
        %v877 = vpop.f32.mrf.mxu0
        %v878 = vadd.f32 0.0, %v877
        %879 = vdwg.mxu0
        %880 = vmatpush.msra.mxu0 0.0
        %881 = vmatpush.msra.mxu0 0.0
        %882 = vmatpush.msra.mxu0 0.0
        %883 = vmatpush.msra.mxu0 0.0
        %884 = vmatpush.msra.mxu0 0.0
        %885 = vmatpush.msra.mxu0 0.0
        %886 = vmatpush.msra.mxu0 0.0
        %887 = vmatpush.msra.mxu0 0.0
        %888 = vmatpush.msra.mxu0 0.0
        %889 = vmatpush.msra.mxu0 0.0
        %890 = vmatpush.msra.mxu0 0.0
        %891 = vmatpush.msra.mxu0 0.0
        %892 = vmatpush.msra.mxu0 0.0
        %893 = vmatpush.msra.mxu0 0.0
        %894 = vmatpush.msra.mxu0 0.0
        %895 = vmatpush.msra.mxu0 %v442
        %896 = vmatmul.f32.gmra.mxu0 %v672
        %v897 = vpop.f32.mrf.mxu0
        %v898 = vadd.f32 0.0, %v897
        %899 = vmatmul.f32.gmra.mxu0 %v675
        %v900 = vpop.f32.mrf.mxu0
        %v901 = vadd.f32 0.0, %v900
        %902 = vmatmul.f32.gmra.mxu0 %v678
        %v903 = vpop.f32.mrf.mxu0
        %v904 = vadd.f32 0.0, %v903
        %905 = vmatmul.f32.gmra.mxu0 %v681
        %v906 = vpop.f32.mrf.mxu0
        %v907 = vadd.f32 0.0, %v906
        %908 = vmatmul.f32.gmra.mxu0 %v684
        %v909 = vpop.f32.mrf.mxu0
        %v910 = vadd.f32 0.0, %v909
        %911 = vmatmul.f32.gmra.mxu0 %v687
        %v912 = vpop.f32.mrf.mxu0
        %v913 = vadd.f32 0.0, %v912
        %914 = vmatmul.f32.gmra.mxu0 %v690
        %v915 = vpop.f32.mrf.mxu0
        %v916 = vadd.f32 0.0, %v915
        %917 = vmatmul.f32.gmra.mxu0 %v693
        %v918 = vpop.f32.mrf.mxu0
        %v919 = vadd.f32 0.0, %v918
        %920 = vmatmul.f32.gmra.mxu0 %v696
        %v921 = vpop.f32.mrf.mxu0
        %v922 = vadd.f32 0.0, %v921
        %923 = vmatmul.f32.gmra.mxu0 %v699
        %v924 = vpop.f32.mrf.mxu0
        %v925 = vadd.f32 0.0, %v924
        %926 = vmatmul.f32.gmra.mxu0 %v702
        %v927 = vpop.f32.mrf.mxu0
        %v928 = vadd.f32 0.0, %v927
        %929 = vmatmul.f32.gmra.mxu0 %v705
        %v930 = vpop.f32.mrf.mxu0
        %v931 = vadd.f32 0.0, %v930
        %932 = vmatmul.f32.gmra.mxu0 %v708
        %v933 = vpop.f32.mrf.mxu0
        %v934 = vadd.f32 0.0, %v933
        %935 = vmatmul.f32.gmra.mxu0 %v711
        %v936 = vpop.f32.mrf.mxu0
        %v937 = vadd.f32 0.0, %v936
        %938 = vmatmul.f32.gmra.mxu0 %v714
        %v939 = vpop.f32.mrf.mxu0
        %v940 = vadd.f32 0.0, %v939
        %941 = vmatmul.f32.gmra.mxu0 %v717
        %v942 = vpop.f32.mrf.mxu0
        %v943 = vadd.f32 0.0, %v942
        %944 = vmatmul.f32.gmra.mxu0 %v720
        %v945 = vpop.f32.mrf.mxu0
        %v946 = vadd.f32 0.0, %v945
        %947 = vmatmul.f32.gmra.mxu0 %v723
        %v948 = vpop.f32.mrf.mxu0
        %v949 = vadd.f32 0.0, %v948
        %950 = vmatmul.f32.gmra.mxu0 %v726
        %v951 = vpop.f32.mrf.mxu0
        %v952 = vadd.f32 0.0, %v951
        %953 = vmatmul.f32.gmra.mxu0 %v729
        %v954 = vpop.f32.mrf.mxu0
        %v955 = vadd.f32 0.0, %v954
        %956 = vmatmul.f32.gmra.mxu0 %v732
        %v957 = vpop.f32.mrf.mxu0
        %v958 = vadd.f32 0.0, %v957
        %959 = vmatmul.f32.gmra.mxu0 %v735
        %v960 = vpop.f32.mrf.mxu0
        %v961 = vadd.f32 0.0, %v960
        %962 = vmatmul.f32.gmra.mxu0 %v738
        %v963 = vpop.f32.mrf.mxu0
        %v964 = vadd.f32 0.0, %v963
        %965 = vmatmul.f32.gmra.mxu0 %v741
        %v966 = vpop.f32.mrf.mxu0
        %v967 = vadd.f32 0.0, %v966
        %968 = vmatmul.f32.gmra.mxu0 %v744
        %v969 = vpop.f32.mrf.mxu0
        %v970 = vadd.f32 0.0, %v969
        %971 = vmatmul.f32.gmra.mxu0 %v747
        %v972 = vpop.f32.mrf.mxu0
        %v973 = vadd.f32 0.0, %v972
        %974 = vmatmul.f32.gmra.mxu0 %v750
        %v975 = vpop.f32.mrf.mxu0
        %v976 = vadd.f32 0.0, %v975
        %977 = vmatmul.f32.gmra.mxu0 %v753
        %v978 = vpop.f32.mrf.mxu0
        %v979 = vadd.f32 0.0, %v978
        %980 = vmatmul.f32.gmra.mxu0 %v756
        %v981 = vpop.f32.mrf.mxu0
        %v982 = vadd.f32 0.0, %v981
        %983 = vmatmul.f32.gmra.mxu0 %v759
        %v984 = vpop.f32.mrf.mxu0
        %v985 = vadd.f32 0.0, %v984
        %986 = vmatmul.f32.gmra.mxu0 %v762
        %v987 = vpop.f32.mrf.mxu0
        %v988 = vadd.f32 0.0, %v987
        %989 = vmatmul.f32.gmra.mxu0 %v765
        %v990 = vpop.f32.mrf.mxu0
        %v991 = vadd.f32 0.0, %v990
        %992 = vdwg.mxu0
        %v993 = vmax.f32 %v785, %v898
        %994 = vmax.xlane.f32.xlu0 %v993
        %v995 = vpop.xlane.xlu0 %994
        %v996 = vmax.f32 %v788, %v901
        %997 = vmax.xlane.f32.xlu0 %v996
        %v998 = vpop.xlane.xlu0 %997
        %v999 = vmax.f32 %v791, %v904
        %1000 = vmax.xlane.f32.xlu0 %v999
        %v1001 = vpop.xlane.xlu0 %1000
        %v1002 = vmax.f32 %v794, %v907
        %1003 = vmax.xlane.f32.xlu0 %v1002
        %v1004 = vpop.xlane.xlu0 %1003
        %v1005 = vmax.f32 %v797, %v910
        %1006 = vmax.xlane.f32.xlu0 %v1005
        %v1007 = vpop.xlane.xlu0 %1006
        %v1008 = vmax.f32 %v800, %v913
        %1009 = vmax.xlane.f32.xlu0 %v1008
        %v1010 = vpop.xlane.xlu0 %1009
        %v1011 = vmax.f32 %v803, %v916
        %1012 = vmax.xlane.f32.xlu0 %v1011
        %v1013 = vpop.xlane.xlu0 %1012
        %v1014 = vmax.f32 %v806, %v919
        %1015 = vmax.xlane.f32.xlu0 %v1014
        %v1016 = vpop.xlane.xlu0 %1015
        %v1017 = vmax.f32 %v809, %v922
        %1018 = vmax.xlane.f32.xlu0 %v1017
        %v1019 = vpop.xlane.xlu0 %1018
        %v1020 = vmax.f32 %v812, %v925
        %1021 = vmax.xlane.f32.xlu0 %v1020
        %v1022 = vpop.xlane.xlu0 %1021
        %v1023 = vmax.f32 %v815, %v928
        %1024 = vmax.xlane.f32.xlu0 %v1023
        %v1025 = vpop.xlane.xlu0 %1024
        %v1026 = vmax.f32 %v818, %v931
        %1027 = vmax.xlane.f32.xlu0 %v1026
        %v1028 = vpop.xlane.xlu0 %1027
        %v1029 = vmax.f32 %v821, %v934
        %1030 = vmax.xlane.f32.xlu0 %v1029
        %v1031 = vpop.xlane.xlu0 %1030
        %v1032 = vmax.f32 %v824, %v937
        %1033 = vmax.xlane.f32.xlu0 %v1032
        %v1034 = vpop.xlane.xlu0 %1033
        %v1035 = vmax.f32 %v827, %v940
        %1036 = vmax.xlane.f32.xlu0 %v1035
        %v1037 = vpop.xlane.xlu0 %1036
        %v1038 = vmax.f32 %v830, %v943
        %1039 = vmax.xlane.f32.xlu0 %v1038
        %v1040 = vpop.xlane.xlu0 %1039
        %v1041 = vmax.f32 %v833, %v946
        %1042 = vmax.xlane.f32.xlu0 %v1041
        %v1043 = vpop.xlane.xlu0 %1042
        %v1044 = vmax.f32 %v836, %v949
        %1045 = vmax.xlane.f32.xlu0 %v1044
        %v1046 = vpop.xlane.xlu0 %1045
        %v1047 = vmax.f32 %v839, %v952
        %1048 = vmax.xlane.f32.xlu0 %v1047
        %v1049 = vpop.xlane.xlu0 %1048
        %v1050 = vmax.f32 %v842, %v955
        %1051 = vmax.xlane.f32.xlu0 %v1050
        %v1052 = vpop.xlane.xlu0 %1051
        %v1053 = vmax.f32 %v845, %v958
        %1054 = vmax.xlane.f32.xlu0 %v1053
        %v1055 = vpop.xlane.xlu0 %1054
        %v1056 = vmax.f32 %v848, %v961
        %1057 = vmax.xlane.f32.xlu0 %v1056
        %v1058 = vpop.xlane.xlu0 %1057
        %v1059 = vmax.f32 %v851, %v964
        %1060 = vmax.xlane.f32.xlu0 %v1059
        %v1061 = vpop.xlane.xlu0 %1060
        %v1062 = vmax.f32 %v854, %v967
        %1063 = vmax.xlane.f32.xlu0 %v1062
        %v1064 = vpop.xlane.xlu0 %1063
        %v1065 = vmax.f32 %v857, %v970
        %1066 = vmax.xlane.f32.xlu0 %v1065
        %v1067 = vpop.xlane.xlu0 %1066
        %v1068 = vmax.f32 %v860, %v973
        %1069 = vmax.xlane.f32.xlu0 %v1068
        %v1070 = vpop.xlane.xlu0 %1069
        %v1071 = vmax.f32 %v863, %v976
        %1072 = vmax.xlane.f32.xlu0 %v1071
        %v1073 = vpop.xlane.xlu0 %1072
        %v1074 = vmax.f32 %v866, %v979
        %1075 = vmax.xlane.f32.xlu0 %v1074
        %v1076 = vpop.xlane.xlu0 %1075
        %v1077 = vmax.f32 %v869, %v982
        %1078 = vmax.xlane.f32.xlu0 %v1077
        %v1079 = vpop.xlane.xlu0 %1078
        %v1080 = vmax.f32 %v872, %v985
        %1081 = vmax.xlane.f32.xlu0 %v1080
        %v1082 = vpop.xlane.xlu0 %1081
        %v1083 = vmax.f32 %v875, %v988
        %1084 = vmax.xlane.f32.xlu0 %v1083
        %v1085 = vpop.xlane.xlu0 %1084
        %v1086 = vmax.f32 %v878, %v991
        %1087 = vmax.xlane.f32.xlu0 %v1086
        %v1088 = vpop.xlane.xlu0 %1087
        %v1089 = vsub.f32 %v785, %v995
        %v1090 = vsub.f32 %v898, %v995
        %v1091 = vsub.f32 %v788, %v998
        %v1092 = vsub.f32 %v901, %v998
        %v1093 = vsub.f32 %v791, %v1001
        %v1094 = vsub.f32 %v904, %v1001
        %v1095 = vsub.f32 %v794, %v1004
        %v1096 = vsub.f32 %v907, %v1004
        %v1097 = vsub.f32 %v797, %v1007
        %v1098 = vsub.f32 %v910, %v1007
        %v1099 = vsub.f32 %v800, %v1010
        %v1100 = vsub.f32 %v913, %v1010
        %v1101 = vsub.f32 %v803, %v1013
        %v1102 = vsub.f32 %v916, %v1013
        %v1103 = vsub.f32 %v806, %v1016
        %v1104 = vsub.f32 %v919, %v1016
        %v1105 = vsub.f32 %v809, %v1019
        %v1106 = vsub.f32 %v922, %v1019
        %v1107 = vsub.f32 %v812, %v1022
        %v1108 = vsub.f32 %v925, %v1022
        %v1109 = vsub.f32 %v815, %v1025
        %v1110 = vsub.f32 %v928, %v1025
        %v1111 = vsub.f32 %v818, %v1028
        %v1112 = vsub.f32 %v931, %v1028
        %v1113 = vsub.f32 %v821, %v1031
        %v1114 = vsub.f32 %v934, %v1031
        %v1115 = vsub.f32 %v824, %v1034
        %v1116 = vsub.f32 %v937, %v1034
        %v1117 = vsub.f32 %v827, %v1037
        %v1118 = vsub.f32 %v940, %v1037
        %v1119 = vsub.f32 %v830, %v1040
        %v1120 = vsub.f32 %v943, %v1040
        %v1121 = vsub.f32 %v833, %v1043
        %v1122 = vsub.f32 %v946, %v1043
        %v1123 = vsub.f32 %v836, %v1046
        %v1124 = vsub.f32 %v949, %v1046
        %v1125 = vsub.f32 %v839, %v1049
        %v1126 = vsub.f32 %v952, %v1049
        %v1127 = vsub.f32 %v842, %v1052
        %v1128 = vsub.f32 %v955, %v1052
        %v1129 = vsub.f32 %v845, %v1055
        %v1130 = vsub.f32 %v958, %v1055
        %v1131 = vsub.f32 %v848, %v1058
        %v1132 = vsub.f32 %v961, %v1058
        %v1133 = vsub.f32 %v851, %v1061
        %v1134 = vsub.f32 %v964, %v1061
        %v1135 = vsub.f32 %v854, %v1064
        %v1136 = vsub.f32 %v967, %v1064
        %v1137 = vsub.f32 %v857, %v1067
        %v1138 = vsub.f32 %v970, %v1067
        %v1139 = vsub.f32 %v860, %v1070
        %v1140 = vsub.f32 %v973, %v1070
        %v1141 = vsub.f32 %v863, %v1073
        %v1142 = vsub.f32 %v976, %v1073
        %v1143 = vsub.f32 %v866, %v1076
        %v1144 = vsub.f32 %v979, %v1076
        %v1145 = vsub.f32 %v869, %v1079
        %v1146 = vsub.f32 %v982, %v1079
        %v1147 = vsub.f32 %v872, %v1082
        %v1148 = vsub.f32 %v985, %v1082
        %v1149 = vsub.f32 %v875, %v1085
        %v1150 = vsub.f32 %v988, %v1085
        %v1151 = vsub.f32 %v878, %v1088
        %v1152 = vsub.f32 %v991, %v1088
        %v1153 = vmul.f32 %v1089, 1.442695
        %v1154 = vpow.pop %v1153
        %v1155 = vmul.f32 %v1090, 1.442695
        %v1156 = vpow.pop %v1155
        %v1157 = vmul.f32 %v1091, 1.442695
        %v1158 = vpow.pop %v1157
        %v1159 = vmul.f32 %v1092, 1.442695
        %v1160 = vpow.pop %v1159
        %v1161 = vmul.f32 %v1093, 1.442695
        %v1162 = vpow.pop %v1161
        %v1163 = vmul.f32 %v1094, 1.442695
        %v1164 = vpow.pop %v1163
        %v1165 = vmul.f32 %v1095, 1.442695
        %v1166 = vpow.pop %v1165
        %v1167 = vmul.f32 %v1096, 1.442695
        %v1168 = vpow.pop %v1167
        %v1169 = vmul.f32 %v1097, 1.442695
        %v1170 = vpow.pop %v1169
        %v1171 = vmul.f32 %v1098, 1.442695
        %v1172 = vpow.pop %v1171
        %v1173 = vmul.f32 %v1099, 1.442695
        %v1174 = vpow.pop %v1173
        %v1175 = vmul.f32 %v1100, 1.442695
        %v1176 = vpow.pop %v1175
        %v1177 = vmul.f32 %v1101, 1.442695
        %v1178 = vpow.pop %v1177
        %v1179 = vmul.f32 %v1102, 1.442695
        %v1180 = vpow.pop %v1179
        %v1181 = vmul.f32 %v1103, 1.442695
        %v1182 = vpow.pop %v1181
        %v1183 = vmul.f32 %v1104, 1.442695
        %v1184 = vpow.pop %v1183
        %v1185 = vmul.f32 %v1105, 1.442695
        %v1186 = vpow.pop %v1185
        %v1187 = vmul.f32 %v1106, 1.442695
        %v1188 = vpow.pop %v1187
        %v1189 = vmul.f32 %v1107, 1.442695
        %v1190 = vpow.pop %v1189
        %v1191 = vmul.f32 %v1108, 1.442695
        %v1192 = vpow.pop %v1191
        %v1193 = vmul.f32 %v1109, 1.442695
        %v1194 = vpow.pop %v1193
        %v1195 = vmul.f32 %v1110, 1.442695
        %v1196 = vpow.pop %v1195
        %v1197 = vmul.f32 %v1111, 1.442695
        %v1198 = vpow.pop %v1197
        %v1199 = vmul.f32 %v1112, 1.442695
        %v1200 = vpow.pop %v1199
        %v1201 = vmul.f32 %v1113, 1.442695
        %v1202 = vpow.pop %v1201
        %v1203 = vmul.f32 %v1114, 1.442695
        %v1204 = vpow.pop %v1203
        %v1205 = vmul.f32 %v1115, 1.442695
        %v1206 = vpow.pop %v1205
        %v1207 = vmul.f32 %v1116, 1.442695
        %v1208 = vpow.pop %v1207
        %v1209 = vmul.f32 %v1117, 1.442695
        %v1210 = vpow.pop %v1209
        %v1211 = vmul.f32 %v1118, 1.442695
        %v1212 = vpow.pop %v1211
        %v1213 = vmul.f32 %v1119, 1.442695
        %v1214 = vpow.pop %v1213
        %v1215 = vmul.f32 %v1120, 1.442695
        %v1216 = vpow.pop %v1215
        %v1217 = vmul.f32 %v1121, 1.442695
        %v1218 = vpow.pop %v1217
        %v1219 = vmul.f32 %v1122, 1.442695
        %v1220 = vpow.pop %v1219
        %v1221 = vmul.f32 %v1123, 1.442695
        %v1222 = vpow.pop %v1221
        %v1223 = vmul.f32 %v1124, 1.442695
        %v1224 = vpow.pop %v1223
        %v1225 = vmul.f32 %v1125, 1.442695
        %v1226 = vpow.pop %v1225
        %v1227 = vmul.f32 %v1126, 1.442695
        %v1228 = vpow.pop %v1227
        %v1229 = vmul.f32 %v1127, 1.442695
        %v1230 = vpow.pop %v1229
        %v1231 = vmul.f32 %v1128, 1.442695
        %v1232 = vpow.pop %v1231
        %v1233 = vmul.f32 %v1129, 1.442695
        %v1234 = vpow.pop %v1233
        %v1235 = vmul.f32 %v1130, 1.442695
        %v1236 = vpow.pop %v1235
        %v1237 = vmul.f32 %v1131, 1.442695
        %v1238 = vpow.pop %v1237
        %v1239 = vmul.f32 %v1132, 1.442695
        %v1240 = vpow.pop %v1239
        %v1241 = vmul.f32 %v1133, 1.442695
        %v1242 = vpow.pop %v1241
        %v1243 = vmul.f32 %v1134, 1.442695
        %v1244 = vpow.pop %v1243
        %v1245 = vmul.f32 %v1135, 1.442695
        %v1246 = vpow.pop %v1245
        %v1247 = vmul.f32 %v1136, 1.442695
        %v1248 = vpow.pop %v1247
        %v1249 = vmul.f32 %v1137, 1.442695
        %v1250 = vpow.pop %v1249
        %v1251 = vmul.f32 %v1138, 1.442695
        %v1252 = vpow.pop %v1251
        %v1253 = vmul.f32 %v1139, 1.442695
        %v1254 = vpow.pop %v1253
        %v1255 = vmul.f32 %v1140, 1.442695
        %v1256 = vpow.pop %v1255
        %v1257 = vmul.f32 %v1141, 1.442695
        %v1258 = vpow.pop %v1257
        %v1259 = vmul.f32 %v1142, 1.442695
        %v1260 = vpow.pop %v1259
        %v1261 = vmul.f32 %v1143, 1.442695
        %v1262 = vpow.pop %v1261
        %v1263 = vmul.f32 %v1144, 1.442695
        %v1264 = vpow.pop %v1263
        %v1265 = vmul.f32 %v1145, 1.442695
        %v1266 = vpow.pop %v1265
        %v1267 = vmul.f32 %v1146, 1.442695
        %v1268 = vpow.pop %v1267
        %v1269 = vmul.f32 %v1147, 1.442695
        %v1270 = vpow.pop %v1269
        %v1271 = vmul.f32 %v1148, 1.442695
        %v1272 = vpow.pop %v1271
        %v1273 = vmul.f32 %v1149, 1.442695
        %v1274 = vpow.pop %v1273
        %v1275 = vmul.f32 %v1150, 1.442695
        %v1276 = vpow.pop %v1275
        %v1277 = vmul.f32 %v1151, 1.442695
        %v1278 = vpow.pop %v1277
        %v1279 = vmul.f32 %v1152, 1.442695
        %v1280 = vpow.pop %v1279
        %v1281 = vadd.f32 %v1154, %v1156
        %1282 = vadd.xlane.f32.xlu0 %v1281
        %v1283 = vpop.xlane.xlu0 %1282
        %v1284 = vadd.f32 %v1158, %v1160
        %1285 = vadd.xlane.f32.xlu0 %v1284
        %v1286 = vpop.xlane.xlu0 %1285
        %v1287 = vadd.f32 %v1162, %v1164
        %1288 = vadd.xlane.f32.xlu0 %v1287
        %v1289 = vpop.xlane.xlu0 %1288
        %v1290 = vadd.f32 %v1166, %v1168
        %1291 = vadd.xlane.f32.xlu0 %v1290
        %v1292 = vpop.xlane.xlu0 %1291
        %v1293 = vadd.f32 %v1170, %v1172
        %1294 = vadd.xlane.f32.xlu0 %v1293
        %v1295 = vpop.xlane.xlu0 %1294
        %v1296 = vadd.f32 %v1174, %v1176
        %1297 = vadd.xlane.f32.xlu0 %v1296
        %v1298 = vpop.xlane.xlu0 %1297
        %v1299 = vadd.f32 %v1178, %v1180
        %1300 = vadd.xlane.f32.xlu0 %v1299
        %v1301 = vpop.xlane.xlu0 %1300
        %v1302 = vadd.f32 %v1182, %v1184
        %1303 = vadd.xlane.f32.xlu0 %v1302
        %v1304 = vpop.xlane.xlu0 %1303
        %v1305 = vadd.f32 %v1186, %v1188
        %1306 = vadd.xlane.f32.xlu0 %v1305
        %v1307 = vpop.xlane.xlu0 %1306
        %v1308 = vadd.f32 %v1190, %v1192
        %1309 = vadd.xlane.f32.xlu0 %v1308
        %v1310 = vpop.xlane.xlu0 %1309
        %v1311 = vadd.f32 %v1194, %v1196
        %1312 = vadd.xlane.f32.xlu0 %v1311
        %v1313 = vpop.xlane.xlu0 %1312
        %v1314 = vadd.f32 %v1198, %v1200
        %1315 = vadd.xlane.f32.xlu0 %v1314
        %v1316 = vpop.xlane.xlu0 %1315
        %v1317 = vadd.f32 %v1202, %v1204
        %1318 = vadd.xlane.f32.xlu0 %v1317
        %v1319 = vpop.xlane.xlu0 %1318
        %v1320 = vadd.f32 %v1206, %v1208
        %1321 = vadd.xlane.f32.xlu0 %v1320
        %v1322 = vpop.xlane.xlu0 %1321
        %v1323 = vadd.f32 %v1210, %v1212
        %1324 = vadd.xlane.f32.xlu0 %v1323
        %v1325 = vpop.xlane.xlu0 %1324
        %v1326 = vadd.f32 %v1214, %v1216
        %1327 = vadd.xlane.f32.xlu0 %v1326
        %v1328 = vpop.xlane.xlu0 %1327
        %v1329 = vadd.f32 %v1218, %v1220
        %1330 = vadd.xlane.f32.xlu0 %v1329
        %v1331 = vpop.xlane.xlu0 %1330
        %v1332 = vadd.f32 %v1222, %v1224
        %1333 = vadd.xlane.f32.xlu0 %v1332
        %v1334 = vpop.xlane.xlu0 %1333
        %v1335 = vadd.f32 %v1226, %v1228
        %1336 = vadd.xlane.f32.xlu0 %v1335
        %v1337 = vpop.xlane.xlu0 %1336
        %v1338 = vadd.f32 %v1230, %v1232
        %1339 = vadd.xlane.f32.xlu0 %v1338
        %v1340 = vpop.xlane.xlu0 %1339
        %v1341 = vadd.f32 %v1234, %v1236
        %1342 = vadd.xlane.f32.xlu0 %v1341
        %v1343 = vpop.xlane.xlu0 %1342
        %v1344 = vadd.f32 %v1238, %v1240
        %1345 = vadd.xlane.f32.xlu0 %v1344
        %v1346 = vpop.xlane.xlu0 %1345
        %v1347 = vadd.f32 %v1242, %v1244
        %1348 = vadd.xlane.f32.xlu0 %v1347
        %v1349 = vpop.xlane.xlu0 %1348
        %v1350 = vadd.f32 %v1246, %v1248
        %1351 = vadd.xlane.f32.xlu0 %v1350
        %v1352 = vpop.xlane.xlu0 %1351
        %v1353 = vadd.f32 %v1250, %v1252
        %1354 = vadd.xlane.f32.xlu0 %v1353
        %v1355 = vpop.xlane.xlu0 %1354
        %v1356 = vadd.f32 %v1254, %v1256
        %1357 = vadd.xlane.f32.xlu0 %v1356
        %v1358 = vpop.xlane.xlu0 %1357
        %v1359 = vadd.f32 %v1258, %v1260
        %1360 = vadd.xlane.f32.xlu0 %v1359
        %v1361 = vpop.xlane.xlu0 %1360
        %v1362 = vadd.f32 %v1262, %v1264
        %1363 = vadd.xlane.f32.xlu0 %v1362
        %v1364 = vpop.xlane.xlu0 %1363
        %v1365 = vadd.f32 %v1266, %v1268
        %1366 = vadd.xlane.f32.xlu0 %v1365
        %v1367 = vpop.xlane.xlu0 %1366
        %v1368 = vadd.f32 %v1270, %v1272
        %1369 = vadd.xlane.f32.xlu0 %v1368
        %v1370 = vpop.xlane.xlu0 %1369
        %v1371 = vadd.f32 %v1274, %v1276
        %1372 = vadd.xlane.f32.xlu0 %v1371
        %v1373 = vpop.xlane.xlu0 %1372
        %v1374 = vadd.f32 %v1278, %v1280
        %1375 = vadd.xlane.f32.xlu0 %v1374
        %v1376 = vpop.xlane.xlu0 %1375
        %v1377 = vrcp.pop %v1283
        %v1378 = vmul.f32 %v1283, %v1377
        %v1379 = vsub.f32 1.0, %v1378
        %v1380 = vmul.f32 %v1377, %v1379
        %v1381 = vadd.f32 %v1377, %v1380
        %vm1382 = vweird.f32 %v1283
        %vm1383 = vweird.f32 %v1377
        %vm1384 = vmor %vm1382, %vm1383
        %v1385 = vsel %vm1384, %v1377, %v1381
        %v1386 = vand.u32 2147483647, %v1283
        %vm1387 = vcmp.eq.f32.partialorder %v1386, 8.507059e+37
        %v1388 = vand.u32 %v1283, 2147483648
        %v1389 = vor.u32 1.1754944e-38, %v1388
        %v1390 = vsel %vm1387, %v1389, %v1385
        %v1391 = vmul.f32 %v1154, %v1390
        %v1392 = vmul.f32 %v1156, %v1390
        %v1393 = vrcp.pop %v1286
        %v1394 = vmul.f32 %v1286, %v1393
        %v1395 = vsub.f32 1.0, %v1394
        %v1396 = vmul.f32 %v1393, %v1395
        %v1397 = vadd.f32 %v1393, %v1396
        %vm1398 = vweird.f32 %v1286
        %vm1399 = vweird.f32 %v1393
        %vm1400 = vmor %vm1398, %vm1399
        %v1401 = vsel %vm1400, %v1393, %v1397
        %v1402 = vand.u32 2147483647, %v1286
        %vm1403 = vcmp.eq.f32.partialorder %v1402, 8.507059e+37
        %v1404 = vand.u32 %v1286, 2147483648
        %v1405 = vor.u32 1.1754944e-38, %v1404
        %v1406 = vsel %vm1403, %v1405, %v1401
        %v1407 = vmul.f32 %v1158, %v1406
        %v1408 = vmul.f32 %v1160, %v1406
        %v1409 = vrcp.pop %v1289
        %v1410 = vmul.f32 %v1289, %v1409
        %v1411 = vsub.f32 1.0, %v1410
        %v1412 = vmul.f32 %v1409, %v1411
        %v1413 = vadd.f32 %v1409, %v1412
        %vm1414 = vweird.f32 %v1289
        %vm1415 = vweird.f32 %v1409
        %vm1416 = vmor %vm1414, %vm1415
        %v1417 = vsel %vm1416, %v1409, %v1413
        %v1418 = vand.u32 2147483647, %v1289
        %vm1419 = vcmp.eq.f32.partialorder %v1418, 8.507059e+37
        %v1420 = vand.u32 %v1289, 2147483648
        %v1421 = vor.u32 1.1754944e-38, %v1420
        %v1422 = vsel %vm1419, %v1421, %v1417
        %v1423 = vmul.f32 %v1162, %v1422
        %v1424 = vmul.f32 %v1164, %v1422
        %v1425 = vrcp.pop %v1292
        %v1426 = vmul.f32 %v1292, %v1425
        %v1427 = vsub.f32 1.0, %v1426
        %v1428 = vmul.f32 %v1425, %v1427
        %v1429 = vadd.f32 %v1425, %v1428
        %vm1430 = vweird.f32 %v1292
        %vm1431 = vweird.f32 %v1425
        %vm1432 = vmor %vm1430, %vm1431
        %v1433 = vsel %vm1432, %v1425, %v1429
        %v1434 = vand.u32 2147483647, %v1292
        %vm1435 = vcmp.eq.f32.partialorder %v1434, 8.507059e+37
        %v1436 = vand.u32 %v1292, 2147483648
        %v1437 = vor.u32 1.1754944e-38, %v1436
        %v1438 = vsel %vm1435, %v1437, %v1433
        %v1439 = vmul.f32 %v1166, %v1438
        %v1440 = vmul.f32 %v1168, %v1438
        %v1441 = vrcp.pop %v1295
        %v1442 = vmul.f32 %v1295, %v1441
        %v1443 = vsub.f32 1.0, %v1442
        %v1444 = vmul.f32 %v1441, %v1443
        %v1445 = vadd.f32 %v1441, %v1444
        %vm1446 = vweird.f32 %v1295
        %vm1447 = vweird.f32 %v1441
        %vm1448 = vmor %vm1446, %vm1447
        %v1449 = vsel %vm1448, %v1441, %v1445
        %v1450 = vand.u32 2147483647, %v1295
        %vm1451 = vcmp.eq.f32.partialorder %v1450, 8.507059e+37
        %v1452 = vand.u32 %v1295, 2147483648
        %v1453 = vor.u32 1.1754944e-38, %v1452
        %v1454 = vsel %vm1451, %v1453, %v1449
        %v1455 = vmul.f32 %v1170, %v1454
        %v1456 = vmul.f32 %v1172, %v1454
        %v1457 = vrcp.pop %v1298
        %v1458 = vmul.f32 %v1298, %v1457
        %v1459 = vsub.f32 1.0, %v1458
        %v1460 = vmul.f32 %v1457, %v1459
        %v1461 = vadd.f32 %v1457, %v1460
        %vm1462 = vweird.f32 %v1298
        %vm1463 = vweird.f32 %v1457
        %vm1464 = vmor %vm1462, %vm1463
        %v1465 = vsel %vm1464, %v1457, %v1461
        %v1466 = vand.u32 2147483647, %v1298
        %vm1467 = vcmp.eq.f32.partialorder %v1466, 8.507059e+37
        %v1468 = vand.u32 %v1298, 2147483648
        %v1469 = vor.u32 1.1754944e-38, %v1468
        %v1470 = vsel %vm1467, %v1469, %v1465
        %v1471 = vmul.f32 %v1174, %v1470
        %v1472 = vmul.f32 %v1176, %v1470
        %v1473 = vrcp.pop %v1301
        %v1474 = vmul.f32 %v1301, %v1473
        %v1475 = vsub.f32 1.0, %v1474
        %v1476 = vmul.f32 %v1473, %v1475
        %v1477 = vadd.f32 %v1473, %v1476
        %vm1478 = vweird.f32 %v1301
        %vm1479 = vweird.f32 %v1473
        %vm1480 = vmor %vm1478, %vm1479
        %v1481 = vsel %vm1480, %v1473, %v1477
        %v1482 = vand.u32 2147483647, %v1301
        %vm1483 = vcmp.eq.f32.partialorder %v1482, 8.507059e+37
        %v1484 = vand.u32 %v1301, 2147483648
        %v1485 = vor.u32 1.1754944e-38, %v1484
        %v1486 = vsel %vm1483, %v1485, %v1481
        %v1487 = vmul.f32 %v1178, %v1486
        %v1488 = vmul.f32 %v1180, %v1486
        %v1489 = vrcp.pop %v1304
        %v1490 = vmul.f32 %v1304, %v1489
        %v1491 = vsub.f32 1.0, %v1490
        %v1492 = vmul.f32 %v1489, %v1491
        %v1493 = vadd.f32 %v1489, %v1492
        %vm1494 = vweird.f32 %v1304
        %vm1495 = vweird.f32 %v1489
        %vm1496 = vmor %vm1494, %vm1495
        %v1497 = vsel %vm1496, %v1489, %v1493
        %v1498 = vand.u32 2147483647, %v1304
        %vm1499 = vcmp.eq.f32.partialorder %v1498, 8.507059e+37
        %v1500 = vand.u32 %v1304, 2147483648
        %v1501 = vor.u32 1.1754944e-38, %v1500
        %v1502 = vsel %vm1499, %v1501, %v1497
        %v1503 = vmul.f32 %v1182, %v1502
        %v1504 = vmul.f32 %v1184, %v1502
        %v1505 = vrcp.pop %v1307
        %v1506 = vmul.f32 %v1307, %v1505
        %v1507 = vsub.f32 1.0, %v1506
        %v1508 = vmul.f32 %v1505, %v1507
        %v1509 = vadd.f32 %v1505, %v1508
        %vm1510 = vweird.f32 %v1307
        %vm1511 = vweird.f32 %v1505
        %vm1512 = vmor %vm1510, %vm1511
        %v1513 = vsel %vm1512, %v1505, %v1509
        %v1514 = vand.u32 2147483647, %v1307
        %vm1515 = vcmp.eq.f32.partialorder %v1514, 8.507059e+37
        %v1516 = vand.u32 %v1307, 2147483648
        %v1517 = vor.u32 1.1754944e-38, %v1516
        %v1518 = vsel %vm1515, %v1517, %v1513
        %v1519 = vmul.f32 %v1186, %v1518
        %v1520 = vmul.f32 %v1188, %v1518
        %v1521 = vrcp.pop %v1310
        %v1522 = vmul.f32 %v1310, %v1521
        %v1523 = vsub.f32 1.0, %v1522
        %v1524 = vmul.f32 %v1521, %v1523
        %v1525 = vadd.f32 %v1521, %v1524
        %vm1526 = vweird.f32 %v1310
        %vm1527 = vweird.f32 %v1521
        %vm1528 = vmor %vm1526, %vm1527
        %v1529 = vsel %vm1528, %v1521, %v1525
        %v1530 = vand.u32 2147483647, %v1310
        %vm1531 = vcmp.eq.f32.partialorder %v1530, 8.507059e+37
        %v1532 = vand.u32 %v1310, 2147483648
        %v1533 = vor.u32 1.1754944e-38, %v1532
        %v1534 = vsel %vm1531, %v1533, %v1529
        %v1535 = vmul.f32 %v1190, %v1534
        %v1536 = vmul.f32 %v1192, %v1534
        %v1537 = vrcp.pop %v1313
        %v1538 = vmul.f32 %v1313, %v1537
        %v1539 = vsub.f32 1.0, %v1538
        %v1540 = vmul.f32 %v1537, %v1539
        %v1541 = vadd.f32 %v1537, %v1540
        %vm1542 = vweird.f32 %v1313
        %vm1543 = vweird.f32 %v1537
        %vm1544 = vmor %vm1542, %vm1543
        %v1545 = vsel %vm1544, %v1537, %v1541
        %v1546 = vand.u32 2147483647, %v1313
        %vm1547 = vcmp.eq.f32.partialorder %v1546, 8.507059e+37
        %v1548 = vand.u32 %v1313, 2147483648
        %v1549 = vor.u32 1.1754944e-38, %v1548
        %v1550 = vsel %vm1547, %v1549, %v1545
        %v1551 = vmul.f32 %v1194, %v1550
        %v1552 = vmul.f32 %v1196, %v1550
        %v1553 = vrcp.pop %v1316
        %v1554 = vmul.f32 %v1316, %v1553
        %v1555 = vsub.f32 1.0, %v1554
        %v1556 = vmul.f32 %v1553, %v1555
        %v1557 = vadd.f32 %v1553, %v1556
        %vm1558 = vweird.f32 %v1316
        %vm1559 = vweird.f32 %v1553
        %vm1560 = vmor %vm1558, %vm1559
        %v1561 = vsel %vm1560, %v1553, %v1557
        %v1562 = vand.u32 2147483647, %v1316
        %vm1563 = vcmp.eq.f32.partialorder %v1562, 8.507059e+37
        %v1564 = vand.u32 %v1316, 2147483648
        %v1565 = vor.u32 1.1754944e-38, %v1564
        %v1566 = vsel %vm1563, %v1565, %v1561
        %v1567 = vmul.f32 %v1198, %v1566
        %v1568 = vmul.f32 %v1200, %v1566
        %v1569 = vrcp.pop %v1319
        %v1570 = vmul.f32 %v1319, %v1569
        %v1571 = vsub.f32 1.0, %v1570
        %v1572 = vmul.f32 %v1569, %v1571
        %v1573 = vadd.f32 %v1569, %v1572
        %vm1574 = vweird.f32 %v1319
        %vm1575 = vweird.f32 %v1569
        %vm1576 = vmor %vm1574, %vm1575
        %v1577 = vsel %vm1576, %v1569, %v1573
        %v1578 = vand.u32 2147483647, %v1319
        %vm1579 = vcmp.eq.f32.partialorder %v1578, 8.507059e+37
        %v1580 = vand.u32 %v1319, 2147483648
        %v1581 = vor.u32 1.1754944e-38, %v1580
        %v1582 = vsel %vm1579, %v1581, %v1577
        %v1583 = vmul.f32 %v1202, %v1582
        %v1584 = vmul.f32 %v1204, %v1582
        %v1585 = vrcp.pop %v1322
        %v1586 = vmul.f32 %v1322, %v1585
        %v1587 = vsub.f32 1.0, %v1586
        %v1588 = vmul.f32 %v1585, %v1587
        %v1589 = vadd.f32 %v1585, %v1588
        %vm1590 = vweird.f32 %v1322
        %vm1591 = vweird.f32 %v1585
        %vm1592 = vmor %vm1590, %vm1591
        %v1593 = vsel %vm1592, %v1585, %v1589
        %v1594 = vand.u32 2147483647, %v1322
        %vm1595 = vcmp.eq.f32.partialorder %v1594, 8.507059e+37
        %v1596 = vand.u32 %v1322, 2147483648
        %v1597 = vor.u32 1.1754944e-38, %v1596
        %v1598 = vsel %vm1595, %v1597, %v1593
        %v1599 = vmul.f32 %v1206, %v1598
        %v1600 = vmul.f32 %v1208, %v1598
        %v1601 = vrcp.pop %v1325
        %v1602 = vmul.f32 %v1325, %v1601
        %v1603 = vsub.f32 1.0, %v1602
        %v1604 = vmul.f32 %v1601, %v1603
        %v1605 = vadd.f32 %v1601, %v1604
        %vm1606 = vweird.f32 %v1325
        %vm1607 = vweird.f32 %v1601
        %vm1608 = vmor %vm1606, %vm1607
        %v1609 = vsel %vm1608, %v1601, %v1605
        %v1610 = vand.u32 2147483647, %v1325
        %vm1611 = vcmp.eq.f32.partialorder %v1610, 8.507059e+37
        %v1612 = vand.u32 %v1325, 2147483648
        %v1613 = vor.u32 1.1754944e-38, %v1612
        %v1614 = vsel %vm1611, %v1613, %v1609
        %v1615 = vmul.f32 %v1210, %v1614
        %v1616 = vmul.f32 %v1212, %v1614
        %v1617 = vrcp.pop %v1328
        %v1618 = vmul.f32 %v1328, %v1617
        %v1619 = vsub.f32 1.0, %v1618
        %v1620 = vmul.f32 %v1617, %v1619
        %v1621 = vadd.f32 %v1617, %v1620
        %vm1622 = vweird.f32 %v1328
        %vm1623 = vweird.f32 %v1617
        %vm1624 = vmor %vm1622, %vm1623
        %v1625 = vsel %vm1624, %v1617, %v1621
        %v1626 = vand.u32 2147483647, %v1328
        %vm1627 = vcmp.eq.f32.partialorder %v1626, 8.507059e+37
        %v1628 = vand.u32 %v1328, 2147483648
        %v1629 = vor.u32 1.1754944e-38, %v1628
        %v1630 = vsel %vm1627, %v1629, %v1625
        %v1631 = vmul.f32 %v1214, %v1630
        %v1632 = vmul.f32 %v1216, %v1630
        %v1633 = vrcp.pop %v1331
        %v1634 = vmul.f32 %v1331, %v1633
        %v1635 = vsub.f32 1.0, %v1634
        %v1636 = vmul.f32 %v1633, %v1635
        %v1637 = vadd.f32 %v1633, %v1636
        %vm1638 = vweird.f32 %v1331
        %vm1639 = vweird.f32 %v1633
        %vm1640 = vmor %vm1638, %vm1639
        %v1641 = vsel %vm1640, %v1633, %v1637
        %v1642 = vand.u32 2147483647, %v1331
        %vm1643 = vcmp.eq.f32.partialorder %v1642, 8.507059e+37
        %v1644 = vand.u32 %v1331, 2147483648
        %v1645 = vor.u32 1.1754944e-38, %v1644
        %v1646 = vsel %vm1643, %v1645, %v1641
        %v1647 = vmul.f32 %v1218, %v1646
        %v1648 = vmul.f32 %v1220, %v1646
        %v1649 = vrcp.pop %v1334
        %v1650 = vmul.f32 %v1334, %v1649
        %v1651 = vsub.f32 1.0, %v1650
        %v1652 = vmul.f32 %v1649, %v1651
        %v1653 = vadd.f32 %v1649, %v1652
        %vm1654 = vweird.f32 %v1334
        %vm1655 = vweird.f32 %v1649
        %vm1656 = vmor %vm1654, %vm1655
        %v1657 = vsel %vm1656, %v1649, %v1653
        %v1658 = vand.u32 2147483647, %v1334
        %vm1659 = vcmp.eq.f32.partialorder %v1658, 8.507059e+37
        %v1660 = vand.u32 %v1334, 2147483648
        %v1661 = vor.u32 1.1754944e-38, %v1660
        %v1662 = vsel %vm1659, %v1661, %v1657
        %v1663 = vmul.f32 %v1222, %v1662
        %v1664 = vmul.f32 %v1224, %v1662
        %v1665 = vrcp.pop %v1337
        %v1666 = vmul.f32 %v1337, %v1665
        %v1667 = vsub.f32 1.0, %v1666
        %v1668 = vmul.f32 %v1665, %v1667
        %v1669 = vadd.f32 %v1665, %v1668
        %vm1670 = vweird.f32 %v1337
        %vm1671 = vweird.f32 %v1665
        %vm1672 = vmor %vm1670, %vm1671
        %v1673 = vsel %vm1672, %v1665, %v1669
        %v1674 = vand.u32 2147483647, %v1337
        %vm1675 = vcmp.eq.f32.partialorder %v1674, 8.507059e+37
        %v1676 = vand.u32 %v1337, 2147483648
        %v1677 = vor.u32 1.1754944e-38, %v1676
        %v1678 = vsel %vm1675, %v1677, %v1673
        %v1679 = vmul.f32 %v1226, %v1678
        %v1680 = vmul.f32 %v1228, %v1678
        %v1681 = vrcp.pop %v1340
        %v1682 = vmul.f32 %v1340, %v1681
        %v1683 = vsub.f32 1.0, %v1682
        %v1684 = vmul.f32 %v1681, %v1683
        %v1685 = vadd.f32 %v1681, %v1684
        %vm1686 = vweird.f32 %v1340
        %vm1687 = vweird.f32 %v1681
        %vm1688 = vmor %vm1686, %vm1687
        %v1689 = vsel %vm1688, %v1681, %v1685
        %v1690 = vand.u32 2147483647, %v1340
        %vm1691 = vcmp.eq.f32.partialorder %v1690, 8.507059e+37
        %v1692 = vand.u32 %v1340, 2147483648
        %v1693 = vor.u32 1.1754944e-38, %v1692
        %v1694 = vsel %vm1691, %v1693, %v1689
        %v1695 = vmul.f32 %v1230, %v1694
        %v1696 = vmul.f32 %v1232, %v1694
        %v1697 = vrcp.pop %v1343
        %v1698 = vmul.f32 %v1343, %v1697
        %v1699 = vsub.f32 1.0, %v1698
        %v1700 = vmul.f32 %v1697, %v1699
        %v1701 = vadd.f32 %v1697, %v1700
        %vm1702 = vweird.f32 %v1343
        %vm1703 = vweird.f32 %v1697
        %vm1704 = vmor %vm1702, %vm1703
        %v1705 = vsel %vm1704, %v1697, %v1701
        %v1706 = vand.u32 2147483647, %v1343
        %vm1707 = vcmp.eq.f32.partialorder %v1706, 8.507059e+37
        %v1708 = vand.u32 %v1343, 2147483648
        %v1709 = vor.u32 1.1754944e-38, %v1708
        %v1710 = vsel %vm1707, %v1709, %v1705
        %v1711 = vmul.f32 %v1234, %v1710
        %v1712 = vmul.f32 %v1236, %v1710
        %v1713 = vrcp.pop %v1346
        %v1714 = vmul.f32 %v1346, %v1713
        %v1715 = vsub.f32 1.0, %v1714
        %v1716 = vmul.f32 %v1713, %v1715
        %v1717 = vadd.f32 %v1713, %v1716
        %vm1718 = vweird.f32 %v1346
        %vm1719 = vweird.f32 %v1713
        %vm1720 = vmor %vm1718, %vm1719
        %v1721 = vsel %vm1720, %v1713, %v1717
        %v1722 = vand.u32 2147483647, %v1346
        %vm1723 = vcmp.eq.f32.partialorder %v1722, 8.507059e+37
        %v1724 = vand.u32 %v1346, 2147483648
        %v1725 = vor.u32 1.1754944e-38, %v1724
        %v1726 = vsel %vm1723, %v1725, %v1721
        %v1727 = vmul.f32 %v1238, %v1726
        %v1728 = vmul.f32 %v1240, %v1726
        %v1729 = vrcp.pop %v1349
        %v1730 = vmul.f32 %v1349, %v1729
        %v1731 = vsub.f32 1.0, %v1730
        %v1732 = vmul.f32 %v1729, %v1731
        %v1733 = vadd.f32 %v1729, %v1732
        %vm1734 = vweird.f32 %v1349
        %vm1735 = vweird.f32 %v1729
        %vm1736 = vmor %vm1734, %vm1735
        %v1737 = vsel %vm1736, %v1729, %v1733
        %v1738 = vand.u32 2147483647, %v1349
        %vm1739 = vcmp.eq.f32.partialorder %v1738, 8.507059e+37
        %v1740 = vand.u32 %v1349, 2147483648
        %v1741 = vor.u32 1.1754944e-38, %v1740
        %v1742 = vsel %vm1739, %v1741, %v1737
        %v1743 = vmul.f32 %v1242, %v1742
        %v1744 = vmul.f32 %v1244, %v1742
        %v1745 = vrcp.pop %v1352
        %v1746 = vmul.f32 %v1352, %v1745
        %v1747 = vsub.f32 1.0, %v1746
        %v1748 = vmul.f32 %v1745, %v1747
        %v1749 = vadd.f32 %v1745, %v1748
        %vm1750 = vweird.f32 %v1352
        %vm1751 = vweird.f32 %v1745
        %vm1752 = vmor %vm1750, %vm1751
        %v1753 = vsel %vm1752, %v1745, %v1749
        %v1754 = vand.u32 2147483647, %v1352
        %vm1755 = vcmp.eq.f32.partialorder %v1754, 8.507059e+37
        %v1756 = vand.u32 %v1352, 2147483648
        %v1757 = vor.u32 1.1754944e-38, %v1756
        %v1758 = vsel %vm1755, %v1757, %v1753
        %v1759 = vmul.f32 %v1246, %v1758
        %v1760 = vmul.f32 %v1248, %v1758
        %v1761 = vrcp.pop %v1355
        %v1762 = vmul.f32 %v1355, %v1761
        %v1763 = vsub.f32 1.0, %v1762
        %v1764 = vmul.f32 %v1761, %v1763
        %v1765 = vadd.f32 %v1761, %v1764
        %vm1766 = vweird.f32 %v1355
        %vm1767 = vweird.f32 %v1761
        %vm1768 = vmor %vm1766, %vm1767
        %v1769 = vsel %vm1768, %v1761, %v1765
        %v1770 = vand.u32 2147483647, %v1355
        %vm1771 = vcmp.eq.f32.partialorder %v1770, 8.507059e+37
        %v1772 = vand.u32 %v1355, 2147483648
        %v1773 = vor.u32 1.1754944e-38, %v1772
        %v1774 = vsel %vm1771, %v1773, %v1769
        %v1775 = vmul.f32 %v1250, %v1774
        %v1776 = vmul.f32 %v1252, %v1774
        %v1777 = vrcp.pop %v1358
        %v1778 = vmul.f32 %v1358, %v1777
        %v1779 = vsub.f32 1.0, %v1778
        %v1780 = vmul.f32 %v1777, %v1779
        %v1781 = vadd.f32 %v1777, %v1780
        %vm1782 = vweird.f32 %v1358
        %vm1783 = vweird.f32 %v1777
        %vm1784 = vmor %vm1782, %vm1783
        %v1785 = vsel %vm1784, %v1777, %v1781
        %v1786 = vand.u32 2147483647, %v1358
        %vm1787 = vcmp.eq.f32.partialorder %v1786, 8.507059e+37
        %v1788 = vand.u32 %v1358, 2147483648
        %v1789 = vor.u32 1.1754944e-38, %v1788
        %v1790 = vsel %vm1787, %v1789, %v1785
        %v1791 = vmul.f32 %v1254, %v1790
        %v1792 = vmul.f32 %v1256, %v1790
        %v1793 = vrcp.pop %v1361
        %v1794 = vmul.f32 %v1361, %v1793
        %v1795 = vsub.f32 1.0, %v1794
        %v1796 = vmul.f32 %v1793, %v1795
        %v1797 = vadd.f32 %v1793, %v1796
        %vm1798 = vweird.f32 %v1361
        %vm1799 = vweird.f32 %v1793
        %vm1800 = vmor %vm1798, %vm1799
        %v1801 = vsel %vm1800, %v1793, %v1797
        %v1802 = vand.u32 2147483647, %v1361
        %vm1803 = vcmp.eq.f32.partialorder %v1802, 8.507059e+37
        %v1804 = vand.u32 %v1361, 2147483648
        %v1805 = vor.u32 1.1754944e-38, %v1804
        %v1806 = vsel %vm1803, %v1805, %v1801
        %v1807 = vmul.f32 %v1258, %v1806
        %v1808 = vmul.f32 %v1260, %v1806
        %v1809 = vrcp.pop %v1364
        %v1810 = vmul.f32 %v1364, %v1809
        %v1811 = vsub.f32 1.0, %v1810
        %v1812 = vmul.f32 %v1809, %v1811
        %v1813 = vadd.f32 %v1809, %v1812
        %vm1814 = vweird.f32 %v1364
        %vm1815 = vweird.f32 %v1809
        %vm1816 = vmor %vm1814, %vm1815
        %v1817 = vsel %vm1816, %v1809, %v1813
        %v1818 = vand.u32 2147483647, %v1364
        %vm1819 = vcmp.eq.f32.partialorder %v1818, 8.507059e+37
        %v1820 = vand.u32 %v1364, 2147483648
        %v1821 = vor.u32 1.1754944e-38, %v1820
        %v1822 = vsel %vm1819, %v1821, %v1817
        %v1823 = vmul.f32 %v1262, %v1822
        %v1824 = vmul.f32 %v1264, %v1822
        %v1825 = vrcp.pop %v1367
        %v1826 = vmul.f32 %v1367, %v1825
        %v1827 = vsub.f32 1.0, %v1826
        %v1828 = vmul.f32 %v1825, %v1827
        %v1829 = vadd.f32 %v1825, %v1828
        %vm1830 = vweird.f32 %v1367
        %vm1831 = vweird.f32 %v1825
        %vm1832 = vmor %vm1830, %vm1831
        %v1833 = vsel %vm1832, %v1825, %v1829
        %v1834 = vand.u32 2147483647, %v1367
        %vm1835 = vcmp.eq.f32.partialorder %v1834, 8.507059e+37
        %v1836 = vand.u32 %v1367, 2147483648
        %v1837 = vor.u32 1.1754944e-38, %v1836
        %v1838 = vsel %vm1835, %v1837, %v1833
        %v1839 = vmul.f32 %v1266, %v1838
        %v1840 = vmul.f32 %v1268, %v1838
        %v1841 = vrcp.pop %v1370
        %v1842 = vmul.f32 %v1370, %v1841
        %v1843 = vsub.f32 1.0, %v1842
        %v1844 = vmul.f32 %v1841, %v1843
        %v1845 = vadd.f32 %v1841, %v1844
        %vm1846 = vweird.f32 %v1370
        %vm1847 = vweird.f32 %v1841
        %vm1848 = vmor %vm1846, %vm1847
        %v1849 = vsel %vm1848, %v1841, %v1845
        %v1850 = vand.u32 2147483647, %v1370
        %vm1851 = vcmp.eq.f32.partialorder %v1850, 8.507059e+37
        %v1852 = vand.u32 %v1370, 2147483648
        %v1853 = vor.u32 1.1754944e-38, %v1852
        %v1854 = vsel %vm1851, %v1853, %v1849
        %v1855 = vmul.f32 %v1270, %v1854
        %v1856 = vmul.f32 %v1272, %v1854
        %v1857 = vrcp.pop %v1373
        %v1858 = vmul.f32 %v1373, %v1857
        %v1859 = vsub.f32 1.0, %v1858
        %v1860 = vmul.f32 %v1857, %v1859
        %v1861 = vadd.f32 %v1857, %v1860
        %vm1862 = vweird.f32 %v1373
        %vm1863 = vweird.f32 %v1857
        %vm1864 = vmor %vm1862, %vm1863
        %v1865 = vsel %vm1864, %v1857, %v1861
        %v1866 = vand.u32 2147483647, %v1373
        %vm1867 = vcmp.eq.f32.partialorder %v1866, 8.507059e+37
        %v1868 = vand.u32 %v1373, 2147483648
        %v1869 = vor.u32 1.1754944e-38, %v1868
        %v1870 = vsel %vm1867, %v1869, %v1865
        %v1871 = vmul.f32 %v1274, %v1870
        %v1872 = vmul.f32 %v1276, %v1870
        %v1873 = vrcp.pop %v1376
        %v1874 = vmul.f32 %v1376, %v1873
        %v1875 = vsub.f32 1.0, %v1874
        %v1876 = vmul.f32 %v1873, %v1875
        %v1877 = vadd.f32 %v1873, %v1876
        %vm1878 = vweird.f32 %v1376
        %vm1879 = vweird.f32 %v1873
        %vm1880 = vmor %vm1878, %vm1879
        %v1881 = vsel %vm1880, %v1873, %v1877
        %v1882 = vand.u32 2147483647, %v1376
        %vm1883 = vcmp.eq.f32.partialorder %v1882, 8.507059e+37
        %v1884 = vand.u32 %v1376, 2147483648
        %v1885 = vor.u32 1.1754944e-38, %v1884
        %v1886 = vsel %vm1883, %v1885, %v1881
        %v1887 = vmul.f32 %v1278, %v1886
        %v1888 = vmul.f32 %v1280, %v1886
        %1889 = vmatpush.xpose.msra.mxu0 %v1631
        %1890 = vmatpush.xpose.msra.mxu0 %v1615
        %1891 = vmatpush.xpose.msra.mxu0 %v1599
        %1892 = vmatpush.xpose.msra.mxu0 %v1583
        %1893 = vmatpush.xpose.msra.mxu0 %v1567
        %1894 = vmatpush.xpose.msra.mxu0 %v1551
        %1895 = vmatpush.xpose.msra.mxu0 %v1535
        %1896 = vmatpush.xpose.msra.mxu0 %v1519
        %1897 = vmatpush.xpose.msra.mxu0 %v1503
        %1898 = vmatpush.xpose.msra.mxu0 %v1487
        %1899 = vmatpush.xpose.msra.mxu0 %v1471
        %1900 = vmatpush.xpose.msra.mxu0 %v1455
        %1901 = vmatpush.xpose.msra.mxu0 %v1439
        %1902 = vmatpush.xpose.msra.mxu0 %v1423
        %1903 = vmatpush.xpose.msra.mxu0 %v1407
        %1904 = vmatpush.xpose.msra.mxu0 %v1391
        %1905 = vmatmul.f32.gmra.mxu0 %v542
        %v1906 = vpop.f32.mrf.mxu0
        %v1907 = vadd.f32 0.0, %v1906
        %1908 = vmatmul.f32.gmra.mxu0 %v545
        %v1909 = vpop.f32.mrf.mxu0
        %v1910 = vadd.f32 0.0, %v1909
        %1911 = vmatmul.f32.gmra.mxu0 %v548
        %v1912 = vpop.f32.mrf.mxu0
        %v1913 = vadd.f32 0.0, %v1912
        %1914 = vmatmul.f32.gmra.mxu0 %v551
        %v1915 = vpop.f32.mrf.mxu0
        %v1916 = vadd.f32 0.0, %v1915
        %1917 = vmatmul.f32.gmra.mxu0 %v554
        %v1918 = vpop.f32.mrf.mxu0
        %v1919 = vadd.f32 0.0, %v1918
        %1920 = vmatmul.f32.gmra.mxu0 %v557
        %v1921 = vpop.f32.mrf.mxu0
        %v1922 = vadd.f32 0.0, %v1921
        %1923 = vmatmul.f32.gmra.mxu0 %v560
        %v1924 = vpop.f32.mrf.mxu0
        %v1925 = vadd.f32 0.0, %v1924
        %1926 = vmatmul.f32.gmra.mxu0 %v563
        %v1927 = vpop.f32.mrf.mxu0
        %v1928 = vadd.f32 0.0, %v1927
        %1929 = vdwg.mxu0
        %1930 = vmatpush.xpose.msra.mxu0 %v1632
        %1931 = vmatpush.xpose.msra.mxu0 %v1616
        %1932 = vmatpush.xpose.msra.mxu0 %v1600
        %1933 = vmatpush.xpose.msra.mxu0 %v1584
        %1934 = vmatpush.xpose.msra.mxu0 %v1568
        %1935 = vmatpush.xpose.msra.mxu0 %v1552
        %1936 = vmatpush.xpose.msra.mxu0 %v1536
        %1937 = vmatpush.xpose.msra.mxu0 %v1520
        %1938 = vmatpush.xpose.msra.mxu0 %v1504
        %1939 = vmatpush.xpose.msra.mxu0 %v1488
        %1940 = vmatpush.xpose.msra.mxu0 %v1472
        %1941 = vmatpush.xpose.msra.mxu0 %v1456
        %1942 = vmatpush.xpose.msra.mxu0 %v1440
        %1943 = vmatpush.xpose.msra.mxu0 %v1424
        %1944 = vmatpush.xpose.msra.mxu0 %v1408
        %1945 = vmatpush.xpose.msra.mxu0 %v1392
        %1946 = vmatmul.f32.gmra.mxu0 %v583
        %v1947 = vpop.f32.mrf.mxu0
        %v1948 = vadd.f32 %v1907, %v1947
        %1949 = vmatmul.f32.gmra.mxu0 %v586
        %v1950 = vpop.f32.mrf.mxu0
        %v1951 = vadd.f32 %v1910, %v1950
        %1952 = vmatmul.f32.gmra.mxu0 %v589
        %v1953 = vpop.f32.mrf.mxu0
        %v1954 = vadd.f32 %v1913, %v1953
        %1955 = vmatmul.f32.gmra.mxu0 %v592
        %v1956 = vpop.f32.mrf.mxu0
        %v1957 = vadd.f32 %v1916, %v1956
        %1958 = vmatmul.f32.gmra.mxu0 %v595
        %v1959 = vpop.f32.mrf.mxu0
        %v1960 = vadd.f32 %v1919, %v1959
        %1961 = vmatmul.f32.gmra.mxu0 %v598
        %v1962 = vpop.f32.mrf.mxu0
        %v1963 = vadd.f32 %v1922, %v1962
        %1964 = vmatmul.f32.gmra.mxu0 %v601
        %v1965 = vpop.f32.mrf.mxu0
        %v1966 = vadd.f32 %v1925, %v1965
        %1967 = vmatmul.f32.gmra.mxu0 %v604
        %v1968 = vpop.f32.mrf.mxu0
        %v1969 = vadd.f32 %v1928, %v1968
        %1970 = vdwg.mxu0
        %1971 = vmatpush.xpose.msra.mxu0 %v1887
        %1972 = vmatpush.xpose.msra.mxu0 %v1871
        %1973 = vmatpush.xpose.msra.mxu0 %v1855
        %1974 = vmatpush.xpose.msra.mxu0 %v1839
        %1975 = vmatpush.xpose.msra.mxu0 %v1823
        %1976 = vmatpush.xpose.msra.mxu0 %v1807
        %1977 = vmatpush.xpose.msra.mxu0 %v1791
        %1978 = vmatpush.xpose.msra.mxu0 %v1775
        %1979 = vmatpush.xpose.msra.mxu0 %v1759
        %1980 = vmatpush.xpose.msra.mxu0 %v1743
        %1981 = vmatpush.xpose.msra.mxu0 %v1727
        %1982 = vmatpush.xpose.msra.mxu0 %v1711
        %1983 = vmatpush.xpose.msra.mxu0 %v1695
        %1984 = vmatpush.xpose.msra.mxu0 %v1679
        %1985 = vmatpush.xpose.msra.mxu0 %v1663
        %1986 = vmatpush.xpose.msra.mxu0 %v1647
        %1987 = vmatmul.f32.gmra.mxu0 %v542
        %v1988 = vpop.f32.mrf.mxu0
        %v1989 = vadd.f32 0.0, %v1988
        %1990 = vmatmul.f32.gmra.mxu0 %v545
        %v1991 = vpop.f32.mrf.mxu0
        %v1992 = vadd.f32 0.0, %v1991
        %1993 = vmatmul.f32.gmra.mxu0 %v548
        %v1994 = vpop.f32.mrf.mxu0
        %v1995 = vadd.f32 0.0, %v1994
        %1996 = vmatmul.f32.gmra.mxu0 %v551
        %v1997 = vpop.f32.mrf.mxu0
        %v1998 = vadd.f32 0.0, %v1997
        %1999 = vmatmul.f32.gmra.mxu0 %v554
        %v2000 = vpop.f32.mrf.mxu0
        %v2001 = vadd.f32 0.0, %v2000
        %2002 = vmatmul.f32.gmra.mxu0 %v557
        %v2003 = vpop.f32.mrf.mxu0
        %v2004 = vadd.f32 0.0, %v2003
        %2005 = vmatmul.f32.gmra.mxu0 %v560
        %v2006 = vpop.f32.mrf.mxu0
        %v2007 = vadd.f32 0.0, %v2006
        %2008 = vmatmul.f32.gmra.mxu0 %v563
        %v2009 = vpop.f32.mrf.mxu0
        %v2010 = vadd.f32 0.0, %v2009
        %2011 = vdwg.mxu0
        %2012 = vmatpush.xpose.msra.mxu0 %v1888
        %2013 = vmatpush.xpose.msra.mxu0 %v1872
        %2014 = vmatpush.xpose.msra.mxu0 %v1856
        %2015 = vmatpush.xpose.msra.mxu0 %v1840
        %2016 = vmatpush.xpose.msra.mxu0 %v1824
        %2017 = vmatpush.xpose.msra.mxu0 %v1808
        %2018 = vmatpush.xpose.msra.mxu0 %v1792
        %2019 = vmatpush.xpose.msra.mxu0 %v1776
        %2020 = vmatpush.xpose.msra.mxu0 %v1760
        %2021 = vmatpush.xpose.msra.mxu0 %v1744
        %2022 = vmatpush.xpose.msra.mxu0 %v1728
        %2023 = vmatpush.xpose.msra.mxu0 %v1712
        %2024 = vmatpush.xpose.msra.mxu0 %v1696
        %2025 = vmatpush.xpose.msra.mxu0 %v1680
        %2026 = vmatpush.xpose.msra.mxu0 %v1664
        %2027 = vmatpush.xpose.msra.mxu0 %v1648
        %2028 = vmatmul.f32.gmra.mxu0 %v583
        %v2029 = vpop.f32.mrf.mxu0
        %v2030 = vadd.f32 %v1989, %v2029
        %2031 = vmatmul.f32.gmra.mxu0 %v586
        %v2032 = vpop.f32.mrf.mxu0
        %v2033 = vadd.f32 %v1992, %v2032
        %2034 = vmatmul.f32.gmra.mxu0 %v589
        %v2035 = vpop.f32.mrf.mxu0
        %v2036 = vadd.f32 %v1995, %v2035
        %2037 = vmatmul.f32.gmra.mxu0 %v592
        %v2038 = vpop.f32.mrf.mxu0
        %v2039 = vadd.f32 %v1998, %v2038
        %2040 = vmatmul.f32.gmra.mxu0 %v595
        %v2041 = vpop.f32.mrf.mxu0
        %v2042 = vadd.f32 %v2001, %v2041
        %2043 = vmatmul.f32.gmra.mxu0 %v598
        %v2044 = vpop.f32.mrf.mxu0
        %v2045 = vadd.f32 %v2004, %v2044
        %2046 = vmatmul.f32.gmra.mxu0 %v601
        %v2047 = vpop.f32.mrf.mxu0
        %v2048 = vadd.f32 %v2007, %v2047
        %2049 = vmatmul.f32.gmra.mxu0 %v604
        %v2050 = vpop.f32.mrf.mxu0
        %v2051 = vadd.f32 %v2010, %v2050
        %2052 = vdwg.mxu0
        %s2053 = sld [smem:[#allocation2]]
        %v2054 = vstv %s2053
        %v2055 = vmul.f32 %v2054, %v1948
        %v2056 = vmul.f32 %v2054, %v2030
        %v2057 = vmul.f32 %v2054, %v1951
        %v2058 = vmul.f32 %v2054, %v2033
        %v2059 = vmul.f32 %v2054, %v1954
        %v2060 = vmul.f32 %v2054, %v2036
        %v2061 = vmul.f32 %v2054, %v1957
        %v2062 = vmul.f32 %v2054, %v2039
        %v2063 = vmul.f32 %v2054, %v1960
        %v2064 = vmul.f32 %v2054, %v2042
        %v2065 = vmul.f32 %v2054, %v1963
        %v2066 = vmul.f32 %v2054, %v2045
        %v2067 = vmul.f32 %v2054, %v1966
        %v2068 = vmul.f32 %v2054, %v2048
        %v2069 = vmul.f32 %v2054, %v1969
        %v2070 = vmul.f32 %v2054, %v2051
        %v2071 = vadd.f32 %v2055, %v327
        %v2072 = vadd.f32 %v2056, %v328
        %v2073 = vadd.f32 %v2057, %v329
        %v2074 = vadd.f32 %v2058, %v330
        %v2075 = vadd.f32 %v2059, %v331
        %v2076 = vadd.f32 %v2060, %v332
        %v2077 = vadd.f32 %v2061, %v333
        %v2078 = vadd.f32 %v2062, %v334
        %v2079 = vadd.f32 %v2063, %v335
        %v2080 = vadd.f32 %v2064, %v336
        %v2081 = vadd.f32 %v2065, %v337
        %v2082 = vadd.f32 %v2066, %v338
        %v2083 = vadd.f32 %v2067, %v339
        %v2084 = vadd.f32 %v2068, %v340
        %v2085 = vadd.f32 %v2069, %v341
        %v2086 = vadd.f32 %v2070, %v342
        %2087 = vst [vmem:[%s326] sm:$0xff] %v2071
        %2088 = vst [vmem:[%s326 + $0x8] sm:$0xff] %v2072
        %2089 = vst [vmem:[%s326 + $0x10] sm:$0xff] %v2073
        %2090 = vst [vmem:[%s326 + $0x18] sm:$0xff] %v2074
        %2091 = vst [vmem:[%s326 + $0x20] sm:$0xff] %v2075
        %2092 = vst [vmem:[%s326 + $0x28] sm:$0xff] %v2076
        %2093 = vst [vmem:[%s326 + $0x30] sm:$0xff] %v2077
        %2094 = vst [vmem:[%s326 + $0x38] sm:$0xff] %v2078
        %2095 = vst [vmem:[%s326 + $0x40] sm:$0xff] %v2079
        %2096 = vst [vmem:[%s326 + $0x48] sm:$0xff] %v2080
        %2097 = vst [vmem:[%s326 + $0x50] sm:$0xff] %v2081
        %2098 = vst [vmem:[%s326 + $0x58] sm:$0xff] %v2082
        %2099 = vst [vmem:[%s326 + $0x60] sm:$0xff] %v2083
        %2100 = vst [vmem:[%s326 + $0x68] sm:$0xff] %v2084
        %2101 = vst [vmem:[%s326 + $0x70] sm:$0xff] %v2085
        %2102 = vst [vmem:[%s326 + $0x78] sm:$0xff] %v2086
        %s2103 = sand.u32 %s207, 1
        %s2104 = scalar_lea.sflag [#allocation5], %s2103
        %s2105 = sand.u32 %s207, 1
        %s2106 = smul.addr %s2105, 128
        %s2107 = scalar_lea.vmem [#allocation6], %s2106
        // Predicated region
        $region57: #{tpu_custom_call.1} parent=51 // pred_check
          %p2108 = pneg %p217
        $region58: #{tpu_custom_call.1} parent=51 // pred_check_branch
          %2110 = sbr.rel (%p2108) target = $region60
        $region59: #{tpu_custom_call.1} parent=51 // pred_region
          %2112 = vsyncadd %s2104, 0
          %s2113 = smul.addr %s26, 16
          %s2114 = smul.addr %s2113, 8
          %s2115 = scalar_lea.hbm %s8, %s2114
          %s2116 = sshll.u32 %s2107, 4
          %s2117 = int_to_ptr.vmem [resolvable:$true] %s2116
          %s2118 = sshll.u32 %s2115, 4
          %s2119 = int_to_ptr.hbm [resolvable:$true] %s2118
          %2124 = dma.vmem_to_hbm [thread:$0]  %s2117, 2048, %s2119, %s2104, 256, 256, 16
        $region60: #{tpu_custom_call.1} parent=51 // pred_fallthru
          _
      $region52: #{tpu_custom_call.1} parent=5 // pred_fallthru
        _
      %p2125 = scmp.le.s32.totalorder 2, %s21
      // Predicated region
      $region61: #{tpu_custom_call.1} parent=5 // pred_check
        %p2126 = pneg %p2125
      $region62: #{tpu_custom_call.1} parent=5 // pred_check_branch
        %2128 = sbr.rel (%p2126) target = $region64
      $region63: #{tpu_custom_call.1} parent=5 // pred_region
        %s2129 = ssub.s32 %s21, 2
        // Predicated region
        $region65: #{tpu_custom_call.1} parent=63 // pred_check
          %p2130 = pneg %p223
        $region66: #{tpu_custom_call.1} parent=63 // pred_check_branch
          %2132 = sbr.rel (%p2130) target = $region68
        $region67: #{tpu_custom_call.1} parent=63 // pred_region
          %s2133 = sand.u32 %s208, 1
          %s2134 = scalar_lea.sflag [#allocation5], %s2133
          %s2135 = sand.u32 %s208, 1
          %s2136 = smul.addr %s2135, 128
          %s2137 = scalar_lea.vmem [#allocation6], %s2136
          %2139 = dma.done %s2134, 2048
        $region68: #{tpu_custom_call.1} parent=63 // pred_fallthru
          _
      $region64: #{tpu_custom_call.1} parent=5 // pred_fallthru
        _
    $region6: #{tpu_custom_call.1} parent=1 // loop_footer
      %s25 = sadd.s32 1, %s21
    $region7: #{tpu_custom_call.1} parent=1 // loop_footer_branch
      %20 = sbr.rel target = $region3
    $region8: #{tpu_custom_call.1} parent=1 // loop_exit
      _
    %2140 = vsyncpa [#allocation4], 1
    %s2141 = scalar_lea.sflag [#allocation4], 1
    %2142 = vsyncpa %s2141, 1
    %2143 = vsyncpa [#allocation5], 1
    %s2144 = scalar_lea.sflag [#allocation5], 1
    %2145 = vsyncpa %s2144, 1

</llo_original>
